<compile_context>
chip_gen: v5e
topology: v5e:2x2
jax: 0.10.0
libtpu: 0.0.40
codegen_flags: <defaults>
</compile_context>

<pallas_src>
import jax
import jax.numpy as jnp
from jax import lax
from jax.experimental import pallas as pl
from jax.experimental.pallas import tpu as pltpu

LN_EPS = 1e-5  # PyTorch nn.LayerNorm default


# ----------------------------------------------------------------------------
# Fused kernel: one grid step = one (sequence, layer) pair.
# Layer axis is the inner ("arbitrary") axis; the activation is carried in VMEM scratch.
# ----------------------------------------------------------------------------
def make_kernel(n_heads):
    def kernel(
        x_ref,
        ln1_g_ref, ln1_b_ref, wqkv_ref, bqkv_ref, wo_ref, bo_ref,
        ln2_g_ref, ln2_b_ref, wff1_ref, bff1_ref, wff2_ref, bff2_ref,
        lnf_g_ref, lnf_b_ref, fcw_ref, fcb_ref,
        o_ref,
        x_sc,
    ):
        f32, bf16 = jnp.float32, jnp.bfloat16
        l = pl.program_id(1)
        n_layers = pl.num_programs(1)

        # Load this sequence's embeddings into the carried activation at layer 0.
        @pl.when(l == 0)
        def _():
            x_sc[...] = x_ref[0]

        x = x_sc[...]                      # (T, E) f32
        T, E = x.shape
        H = n_heads
        D = E // H

        def layernorm(v, g, b):
            mu = jnp.mean(v, axis=-1, keepdims=True)
            var = jnp.mean((v - mu) ** 2, axis=-1, keepdims=True)
            return (v - mu) * lax.rsqrt(var + LN_EPS) * g + b

        # ---- LayerNorm 1 (residual base is the NORMED activation, as in the reference)
        xn = layernorm(x, ln1_g_ref[0], ln1_b_ref[0])
        xn_bf = xn.astype(bf16)

        # ---- Fused QKV projection: single lane-dense (T,E)@(E,3E) MXU matmul.
        # 1/sqrt(D) is already folded into the Q columns of wqkv / bqkv.
        qkv = jnp.dot(xn_bf, wqkv_ref[0], preferred_element_type=f32) + bqkv_ref[0]  # (T, 3E)

        # Split heads (static lane slices, stacked on a leading batch axis).
        q = jnp.stack([qkv[:,          h * D:          (h + 1) * D] for h in range(H)], axis=0)
        k = jnp.stack([qkv[:,      E + h * D:      E + (h + 1) * D] for h in range(H)], axis=0)
        v = jnp.stack([qkv[:, 2 * E + h * D: 2 * E + (h + 1) * D] for h in range(H)], axis=0)
        # q, k, v: (H, T, D) f32

        # ---- Causal scores + softmax (mask generated in-kernel; no HBM mask DMA).
        s = jnp.einsum('htd,hsd->hts', q.astype(bf16), k.astype(bf16),
                       preferred_element_type=f32)                        # (H, T, T)
        row = lax.broadcasted_iota(jnp.int32, (T, T), 0)
        col = lax.broadcasted_iota(jnp.int32, (T, T), 1)
        bias = jnp.where(col <= row, 0.0, -1e30).astype(f32)              # finite, NaN-safe
        s = s + bias[None, :, :]
        s = s - jnp.max(s, axis=-1, keepdims=True)
        p = jnp.exp(s)
        p = p * pl.reciprocal(jnp.sum(p, axis=-1, keepdims=True), approx=False)

        o = jnp.einsum('hts,hsd->htd', p.astype(bf16), v.astype(bf16),
                       preferred_element_type=f32)                        # (H, T, D)

        # ---- Concat heads (torch.cat order) -> single (T,E)@(E,E) output projection.
        o_cat = jnp.concatenate([o[h] for h in range(H)], axis=-1)        # (T, E)
        attn = jnp.dot(o_cat.astype(bf16), wo_ref[0],
                       preferred_element_type=f32) + bo_ref[0]            # (T, E)

        x1 = xn + attn                     # residual onto normed x (matches reference)

        # ---- LayerNorm 2 + FeedForward
        x2 = layernorm(x1, ln2_g_ref[0], ln2_b_ref[0])
        h1 = jnp.dot(x2.astype(bf16), wff1_ref[0],
                     preferred_element_type=f32) + bff1_ref[0]            # (T, 4E)
        h1 = jnp.maximum(h1, 0.0)
        ff = jnp.dot(h1.astype(bf16), wff2_ref[0],
                     preferred_element_type=f32) + bff2_ref[0]            # (T, E)
        x_new = x2 + ff                    # residual onto normed x (matches reference)
        x_sc[...] = x_new

        # ---- Final LayerNorm + vocab projection (lane-dense, padded vocab) on last layer.
        @pl.when(l == n_layers - 1)
        def _():
            xf = layernorm(x_new, lnf_g_ref[...], lnf_b_ref[...])
            o_ref[0] = jnp.dot(xf.astype(bf16), fcw_ref[...],
                               preferred_element_type=f32) + fcb_ref[...]

    return kernel


# ----------------------------------------------------------------------------
# pallas_call wrapper: grid=(B, L), batch parallel / layers streamed.
# ----------------------------------------------------------------------------
def run_fused(x, params, n_heads):
    B, T, E = x.shape
    Vp = params["fc_w"].shape[1]
    L = params["wqkv"].shape[0]

    def layer_spec(shape):
        zeros = (0,) * (len(shape) - 1)
        return pl.BlockSpec((1,) + tuple(shape[1:]), lambda b, l: (l,) + zeros)

    def full_spec(shape):
        zeros = (0,) * len(shape)
        return pl.BlockSpec(tuple(shape), lambda b, l: zeros)

    args = (
        x,
        params["ln1_g"], params["ln1_b"], params["wqkv"], params["bqkv"],
        params["wo"], params["bo"], params["ln2_g"], params["ln2_b"],
        params["w_ff1"], params["b_ff1"], params["w_ff2"], params["b_ff2"],
        params["ln_f_g"], params["ln_f_b"], params["fc_w"], params["fc_b"],
    )

    in_specs = [pl.BlockSpec((1, T, E), lambda b, l: (b, 0, 0))]
    in_specs += [layer_spec(a.shape) for a in args[1:13]]    # per-layer stacked weights
    in_specs += [full_spec(a.shape) for a in args[13:]]      # final LN + vocab projection

    out_spec = pl.BlockSpec((1, T, Vp), lambda b, l: (b, 0, 0))

    # Explicit VMEM budget: double-buffered per-layer weight blocks + resident tensors
    # + activation scratch + output block, with headroom; capped for v7x (64 MiB physical).
    def nbytes(a):
        return a.size * a.dtype.itemsize

    budget = (2 * sum(nbytes(a) // L for a in args[1:13])
              + sum(nbytes(a) for a in args[13:])
              + 2 * (T * E * 4) + 2 * (T * Vp * 4) + (T * E * 4)
              + (4 << 20))
    vmem_bytes = int(min(max(budget, 16 << 20), 48 << 20))

    return pl.pallas_call(
        make_kernel(n_heads),
        out_shape=jax.ShapeDtypeStruct((B, T, Vp), jnp.float32),
        grid=(B, L),
        in_specs=in_specs,
        out_specs=out_spec,
        scratch_shapes=[pltpu.VMEM((T, E), jnp.float32)],
        compiler_params=pltpu.CompilerParams(
            dimension_semantics=("parallel", "arbitrary"),
            vmem_limit_bytes=vmem_bytes,
        ),
    )(*args)


# ----------------------------------------------------------------------------
# Parameters (deterministic synthetic weights, stacked per-block along axis 0)
# ----------------------------------------------------------------------------
def init_params(key, vocab_size, n_embed, block_size, n_heads, n_blocks):
    E, H, L = n_embed, n_heads, n_blocks
    D = E // H
    F = 4 * E
    Vp = ((vocab_size + 127) // 128) * 128   # pad vocab to lane width (128)
    f32, bf16 = jnp.float32, jnp.bfloat16
    scale = D ** (-0.5)

    def nrm(k, shape, s=0.02):
        return s * jax.random.normal(k, shape, dtype=f32)

    keys = jax.random.split(key, 10)

    # Fused QKV weight: columns [0:E]=Q (head-major, pre-scaled), [E:2E]=K, [2E:3E]=V.
    wq = nrm(keys[3], (L, E, E)) * scale     # fold 1/sqrt(head_size) into Wq
    wk = nrm(keys[4], (L, E, E))
    wv = nrm(keys[5], (L, E, E))
    wqkv = jnp.concatenate([wq, wk, wv], axis=-1).astype(bf16)            # (L, E, 3E)

    fc_w = jnp.pad(nrm(keys[2], (E, vocab_size)),
                   ((0, 0), (0, Vp - vocab_size))).astype(bf16)           # (E, Vp)

    return {
        "tok_emb": nrm(keys[0], (vocab_size, E)),
        "pos_emb": nrm(keys[1], (block_size, E)),
        "ln_f_g": jnp.ones((1, E), f32), "ln_f_b": jnp.zeros((1, E), f32),
        "fc_w": fc_w, "fc_b": jnp.zeros((1, Vp), f32),
        # ---- stacked per-block parameters (leading layer axis L)
        "ln1_g": jnp.ones((L, 1, E), f32), "ln1_b": jnp.zeros((L, 1, E), f32),
        "wqkv": wqkv, "bqkv": jnp.zeros((L, 1, 3 * E), f32),
        "wo": nrm(keys[6], (L, E, E)).astype(bf16), "bo": jnp.zeros((L, 1, E), f32),
        "ln2_g": jnp.ones((L, 1, E), f32), "ln2_b": jnp.zeros((L, 1, E), f32),
        "w_ff1": nrm(keys[7], (L, E, F)).astype(bf16), "b_ff1": jnp.zeros((L, 1, F), f32),
        "w_ff2": nrm(keys[8], (L, F, E)).astype(bf16), "b_ff2": jnp.zeros((L, 1, E), f32),
    }


# ----------------------------------------------------------------------------
# Forward pass (y=None => logits only)
# ----------------------------------------------------------------------------
def transformer_forward(token_ids, params, n_heads):
    B, T = token_ids.shape
    V, E = params["tok_emb"].shape
    assert T == params["pos_emb"].shape[0], "sequence length must equal block_size"

    # Embedding lookups are gathers: plain JAX glue around the kernel.
    tok = jnp.take(params["tok_emb"], token_ids, axis=0)          # (B, T, E)
    x = (tok + params["pos_emb"][None, :, :]).astype(jnp.float32)  # dropout == identity (eval)

    logits_padded = run_fused(x, params, n_heads)                 # (B, T, Vp) lane-dense
    return logits_padded[:, :, :V]


if __name__ == "__main__":
    vocab_size = 16
    n_embed = 32
    block_size = 8       # T must equal block_size (matches reference pos-embedding add)
    n_heads = 4
    n_blocks = 2
    batch = 2

    key = jax.random.PRNGKey(0)
    k_par, k_tok = jax.random.split(key)
    params = init_params(k_par, vocab_size, n_embed, block_size, n_heads, n_blocks)
    token_ids = jax.random.randint(k_tok, (batch, block_size), 0, vocab_size, dtype=jnp.int32)

    logits = transformer_forward(token_ids, params, n_heads)
    logits = jax.block_until_ready(logits)
    assert logits.shape == (batch, block_size, vocab_size)
    assert bool(jnp.all(jnp.isfinite(logits)))
    print("KERNEL_OK")
</pallas_src>

<mosaic_0001>
module attributes {stable_mosaic.version = 11 : i64} {
  func.func @kernel(%arg0: i32, %arg1: i32, %arg2: memref<1x8x32xf32, #tpu.memory_space<vmem>>, %arg3: memref<1x1x32xf32, #tpu.memory_space<vmem>>, %arg4: memref<1x1x32xf32, #tpu.memory_space<vmem>>, %arg5: memref<1x32x96xbf16, #tpu.memory_space<vmem>>, %arg6: memref<1x1x96xf32, #tpu.memory_space<vmem>>, %arg7: memref<1x32x32xbf16, #tpu.memory_space<vmem>>, %arg8: memref<1x1x32xf32, #tpu.memory_space<vmem>>, %arg9: memref<1x1x32xf32, #tpu.memory_space<vmem>>, %arg10: memref<1x1x32xf32, #tpu.memory_space<vmem>>, %arg11: memref<1x32x128xbf16, #tpu.memory_space<vmem>>, %arg12: memref<1x1x128xf32, #tpu.memory_space<vmem>>, %arg13: memref<1x128x32xbf16, #tpu.memory_space<vmem>>, %arg14: memref<1x1x32xf32, #tpu.memory_space<vmem>>, %arg15: memref<1x32xf32, #tpu.memory_space<vmem>>, %arg16: memref<1x32xf32, #tpu.memory_space<vmem>>, %arg17: memref<32x128xbf16, #tpu.memory_space<vmem>>, %arg18: memref<1x128xf32, #tpu.memory_space<vmem>>, %arg19: memref<1x8x128xf32, #tpu.memory_space<vmem>>, %arg20: memref<8x32xf32, #tpu.memory_space<vmem>>) attributes {dimension_semantics = [#tpu.dimension_semantics<parallel>, #tpu.dimension_semantics<arbitrary>], iteration_bounds = array<i64: 2, 2>, scalar_prefetch = 0 : i64, scratch_operands = 1 : i64, tpu.core_type = #tpu.core_type<tc>, window_params = [{transform_indices = @transform_0, window_bounds = array<i64: 1, 8, 32>}, {transform_indices = @transform_1, window_bounds = array<i64: 1, 1, 32>}, {transform_indices = @transform_2, window_bounds = array<i64: 1, 1, 32>}, {transform_indices = @transform_3, window_bounds = array<i64: 1, 32, 96>}, {transform_indices = @transform_4, window_bounds = array<i64: 1, 1, 96>}, {transform_indices = @transform_5, window_bounds = array<i64: 1, 32, 32>}, {transform_indices = @transform_6, window_bounds = array<i64: 1, 1, 32>}, {transform_indices = @transform_7, window_bounds = array<i64: 1, 1, 32>}, {transform_indices = @transform_8, window_bounds = array<i64: 1, 1, 32>}, {transform_indices = @transform_9, window_bounds = array<i64: 1, 32, 128>}, {transform_indices = @transform_10, window_bounds = array<i64: 1, 1, 128>}, {transform_indices = @transform_11, window_bounds = array<i64: 1, 128, 32>}, {transform_indices = @transform_12, window_bounds = array<i64: 1, 1, 32>}, {pipeline_mode = #tpu.pipeline_mode<synchronous>, transform_indices = @transform_13, window_bounds = array<i64: 1, 32>}, {pipeline_mode = #tpu.pipeline_mode<synchronous>, transform_indices = @transform_14, window_bounds = array<i64: 1, 32>}, {pipeline_mode = #tpu.pipeline_mode<synchronous>, transform_indices = @transform_15, window_bounds = array<i64: 32, 128>}, {pipeline_mode = #tpu.pipeline_mode<synchronous>, transform_indices = @transform_16, window_bounds = array<i64: 1, 128>}, {transform_indices = @transform_17, window_bounds = array<i64: 1, 8, 128>}]} {
    %c0_i32 = arith.constant 0 : i32
    %0 = arith.cmpi eq, %arg1, %c0_i32 : i32
    %1 = arith.extui %0 : i1 to i32
    %c0_i32_0 = arith.constant 0 : i32
    %2 = arith.cmpi ne, %1, %c0_i32_0 : i32
    scf.if %2 {
      %c0_61 = arith.constant 0 : index
      %c0_62 = arith.constant 0 : index
      %c0_63 = arith.constant 0 : index
      %157 = vector.load %arg2[%c0_61, %c0_62, %c0_63] : memref<1x8x32xf32, #tpu.memory_space<vmem>>, vector<1x8x32xf32>
      %158 = vector.shape_cast %157 : vector<1x8x32xf32> to vector<8x32xf32>
      %c0_64 = arith.constant 0 : index
      %c0_65 = arith.constant 0 : index
      %159 = vector.load %arg20[%c0_64, %c0_65] : memref<8x32xf32, #tpu.memory_space<vmem>>, vector<8x32xf32>
      tpu.vector_store %arg20[%c0_64, %c0_65], %158 {strides = array<i32>} : memref<8x32xf32, #tpu.memory_space<vmem>>, vector<8x32xf32>,
    } else {
    }
    %c0 = arith.constant 0 : index
    %c0_1 = arith.constant 0 : index
    %3 = vector.load %arg20[%c0, %c0_1] : memref<8x32xf32, #tpu.memory_space<vmem>>, vector<8x32xf32>
    %c0_2 = arith.constant 0 : index
    %c0_3 = arith.constant 0 : index
    %c0_4 = arith.constant 0 : index
    %4 = vector.load %arg3[%c0_2, %c0_3, %c0_4] : memref<1x1x32xf32, #tpu.memory_space<vmem>>, vector<1x1x32xf32>
    %5 = vector.shape_cast %4 : vector<1x1x32xf32> to vector<1x32xf32>
    %c0_5 = arith.constant 0 : index
    %c0_6 = arith.constant 0 : index
    %c0_7 = arith.constant 0 : index
    %6 = vector.load %arg4[%c0_5, %c0_6, %c0_7] : memref<1x1x32xf32, #tpu.memory_space<vmem>>, vector<1x1x32xf32>
    %7 = vector.shape_cast %6 : vector<1x1x32xf32> to vector<1x32xf32>
    %cst = arith.constant dense<0.000000e+00> : vector<8xf32>
    %8 = vector.multi_reduction <add>, %3, %cst [1] : vector<8x32xf32> to vector<8xf32>
    %9 = vector.shape_cast %8 : vector<8xf32> to vector<8x1xf32>
    %cst_8 = arith.constant 3.200000e+01 : f32
    %10 = vector.broadcast %cst_8 : f32 to vector<8x1xf32>
    %11 = arith.divf %9, %10 : vector<8x1xf32>
    %12 = vector.broadcast %11 : vector<8x1xf32> to vector<8x32xf32>
    %13 = arith.subf %3, %12 : vector<8x32xf32>
    %14 = arith.mulf %13, %13 : vector<8x32xf32>
    %cst_9 = arith.constant dense<0.000000e+00> : vector<8xf32>
    %15 = vector.multi_reduction <add>, %14, %cst_9 [1] : vector<8x32xf32> to vector<8xf32>
    %16 = vector.shape_cast %15 : vector<8xf32> to vector<8x1xf32>
    %cst_10 = arith.constant 3.200000e+01 : f32
    %17 = vector.broadcast %cst_10 : f32 to vector<8x1xf32>
    %18 = arith.divf %16, %17 : vector<8x1xf32>
    %19 = vector.broadcast %11 : vector<8x1xf32> to vector<8x32xf32>
    %20 = arith.subf %3, %19 : vector<8x32xf32>
    %cst_11 = arith.constant 9.99999974E-6 : f32
    %21 = vector.broadcast %cst_11 : f32 to vector<8x1xf32>
    %22 = arith.addf %18, %21 : vector<8x1xf32>
    %23 = math.rsqrt %22 : vector<8x1xf32>
    %24 = vector.broadcast %23 : vector<8x1xf32> to vector<8x32xf32>
    %25 = arith.mulf %20, %24 : vector<8x32xf32>
    %26 = vector.broadcast %5 : vector<1x32xf32> to vector<8x32xf32>
    %27 = arith.mulf %25, %26 : vector<8x32xf32>
    %28 = vector.broadcast %7 : vector<1x32xf32> to vector<8x32xf32>
    %29 = arith.addf %27, %28 : vector<8x32xf32>
    %30 = arith.truncf %29 : vector<8x32xf32> to vector<8x32xbf16>
    %c0_12 = arith.constant 0 : index
    %c0_13 = arith.constant 0 : index
    %c0_14 = arith.constant 0 : index
    %31 = vector.load %arg5[%c0_12, %c0_13, %c0_14] : memref<1x32x96xbf16, #tpu.memory_space<vmem>>, vector<1x32x96xbf16>
    %32 = vector.shape_cast %31 : vector<1x32x96xbf16> to vector<32x96xbf16>
    %cst_15 = arith.constant dense<0.000000e+00> : vector<8x96xf32>
    %33 = tpu.matmul %30, %32, %cst_15 {dimension_numbers = #tpu.dot_dimension_numbers<[1], [0], [0], [1], [0, 0, 1, 1], [], []>} : vector<8x32xbf16>, vector<32x96xbf16>, vector<8x96xf32> -> vector<8x96xf32>
    %c0_16 = arith.constant 0 : index
    %c0_17 = arith.constant 0 : index
    %c0_18 = arith.constant 0 : index
    %34 = vector.load %arg6[%c0_16, %c0_17, %c0_18] : memref<1x1x96xf32, #tpu.memory_space<vmem>>, vector<1x1x96xf32>
    %35 = vector.shape_cast %34 : vector<1x1x96xf32> to vector<1x96xf32>
    %36 = vector.broadcast %35 : vector<1x96xf32> to vector<8x96xf32>
    %37 = arith.addf %33, %36 : vector<8x96xf32>
    %38 = vector.extract_strided_slice %37 {offsets = [0, 0], sizes = [8, 8], strides = [1, 1]} : vector<8x96xf32> to vector<8x8xf32>
    %39 = vector.extract_strided_slice %37 {offsets = [0, 8], sizes = [8, 8], strides = [1, 1]} : vector<8x96xf32> to vector<8x8xf32>
    %40 = vector.extract_strided_slice %37 {offsets = [0, 16], sizes = [8, 8], strides = [1, 1]} : vector<8x96xf32> to vector<8x8xf32>
    %41 = vector.extract_strided_slice %37 {offsets = [0, 24], sizes = [8, 8], strides = [1, 1]} : vector<8x96xf32> to vector<8x8xf32>
    %42 = vector.shape_cast %38 : vector<8x8xf32> to vector<1x8x8xf32>
    %43 = vector.shape_cast %39 : vector<8x8xf32> to vector<1x8x8xf32>
    %44 = vector.shape_cast %40 : vector<8x8xf32> to vector<1x8x8xf32>
    %45 = vector.shape_cast %41 : vector<8x8xf32> to vector<1x8x8xf32>
    %46 = tpu.concatenate %42, %43, %44, %45 in 0 : vector<1x8x8xf32>, vector<1x8x8xf32>, vector<1x8x8xf32>, vector<1x8x8xf32> -> vector<4x8x8xf32>
    %47 = vector.extract_strided_slice %37 {offsets = [0, 32], sizes = [8, 8], strides = [1, 1]} : vector<8x96xf32> to vector<8x8xf32>
    %48 = vector.extract_strided_slice %37 {offsets = [0, 40], sizes = [8, 8], strides = [1, 1]} : vector<8x96xf32> to vector<8x8xf32>
    %49 = vector.extract_strided_slice %37 {offsets = [0, 48], sizes = [8, 8], strides = [1, 1]} : vector<8x96xf32> to vector<8x8xf32>
    %50 = vector.extract_strided_slice %37 {offsets = [0, 56], sizes = [8, 8], strides = [1, 1]} : vector<8x96xf32> to vector<8x8xf32>
    %51 = vector.shape_cast %47 : vector<8x8xf32> to vector<1x8x8xf32>
    %52 = vector.shape_cast %48 : vector<8x8xf32> to vector<1x8x8xf32>
    %53 = vector.shape_cast %49 : vector<8x8xf32> to vector<1x8x8xf32>
    %54 = vector.shape_cast %50 : vector<8x8xf32> to vector<1x8x8xf32>
    %55 = tpu.concatenate %51, %52, %53, %54 in 0 : vector<1x8x8xf32>, vector<1x8x8xf32>, vector<1x8x8xf32>, vector<1x8x8xf32> -> vector<4x8x8xf32>
    %56 = vector.extract_strided_slice %37 {offsets = [0, 64], sizes = [8, 8], strides = [1, 1]} : vector<8x96xf32> to vector<8x8xf32>
    %57 = vector.extract_strided_slice %37 {offsets = [0, 72], sizes = [8, 8], strides = [1, 1]} : vector<8x96xf32> to vector<8x8xf32>
    %58 = vector.extract_strided_slice %37 {offsets = [0, 80], sizes = [8, 8], strides = [1, 1]} : vector<8x96xf32> to vector<8x8xf32>
    %59 = vector.extract_strided_slice %37 {offsets = [0, 88], sizes = [8, 8], strides = [1, 1]} : vector<8x96xf32> to vector<8x8xf32>
    %60 = vector.shape_cast %56 : vector<8x8xf32> to vector<1x8x8xf32>
    %61 = vector.shape_cast %57 : vector<8x8xf32> to vector<1x8x8xf32>
    %62 = vector.shape_cast %58 : vector<8x8xf32> to vector<1x8x8xf32>
    %63 = vector.shape_cast %59 : vector<8x8xf32> to vector<1x8x8xf32>
    %64 = tpu.concatenate %60, %61, %62, %63 in 0 : vector<1x8x8xf32>, vector<1x8x8xf32>, vector<1x8x8xf32>, vector<1x8x8xf32> -> vector<4x8x8xf32>
    %65 = arith.truncf %46 : vector<4x8x8xf32> to vector<4x8x8xbf16>
    %66 = arith.truncf %55 : vector<4x8x8xf32> to vector<4x8x8xbf16>
    "tpu.trace_start"() <{level = 10 : i32, message = "htd,hsd->hts"}> : () -> ()
    %cst_19 = arith.constant dense<0.000000e+00> : vector<4x8x8xf32>
    %67 = tpu.matmul %65, %66, %cst_19 {dimension_numbers = #tpu.dot_dimension_numbers<[2], [2], [1], [1], [0, 0, 0, 1, 1, 1], [0], [0]>} : vector<4x8x8xbf16>, vector<4x8x8xbf16>, vector<4x8x8xf32> -> vector<4x8x8xf32>
    "tpu.trace_stop"() : () -> ()
    %68 = tpu.iota {dimensions = array<i32: 0>} : vector<8x8xi32>
    %69 = tpu.iota {dimensions = array<i32: 1>} : vector<8x8xi32>
    %70 = arith.cmpi sle, %69, %68 : vector<8x8xi32>
    %cst_20 = arith.constant 0.000000e+00 : f32
    %cst_21 = arith.constant -1.000000e+30 : f32
    %71 = vector.broadcast %cst_20 : f32 to vector<8x8xf32>
    %72 = vector.broadcast %cst_21 : f32 to vector<8x8xf32>
    %73 = arith.select %70, %71, %72 : vector<8x8xi1>, vector<8x8xf32>
    %74 = vector.shape_cast %73 : vector<8x8xf32> to vector<1x8x8xf32>
    %75 = vector.broadcast %74 : vector<1x8x8xf32> to vector<4x8x8xf32>
    %76 = arith.addf %67, %75 : vector<4x8x8xf32>
    %cst_22 = arith.constant dense<0xFF800000> : vector<4x8xf32>
    %77 = vector.multi_reduction <maximumf>, %76, %cst_22 [2] : vector<4x8x8xf32> to vector<4x8xf32>
    %78 = vector.shape_cast %77 : vector<4x8xf32> to vector<4x8x1xf32>
    %79 = vector.broadcast %78 : vector<4x8x1xf32> to vector<4x8x8xf32>
    %80 = arith.subf %76, %79 : vector<4x8x8xf32>
    %81 = math.exp %80 : vector<4x8x8xf32>
    %cst_23 = arith.constant dense<0.000000e+00> : vector<4x8xf32>
    %82 = vector.multi_reduction <add>, %81, %cst_23 [2] : vector<4x8x8xf32> to vector<4x8xf32>
    %83 = vector.shape_cast %82 : vector<4x8xf32> to vector<4x8x1xf32>
    %84 = tpu.reciprocal %83 : vector<4x8x1xf32> -> vector<4x8x1xf32>
    %85 = vector.broadcast %84 : vector<4x8x1xf32> to vector<4x8x8xf32>
    %86 = arith.mulf %81, %85 : vector<4x8x8xf32>
    %87 = arith.truncf %86 : vector<4x8x8xf32> to vector<4x8x8xbf16>
    %88 = arith.truncf %64 : vector<4x8x8xf32> to vector<4x8x8xbf16>
    "tpu.trace_start"() <{level = 10 : i32, message = "hts,hsd->htd"}> : () -> ()
    %cst_24 = arith.constant dense<0.000000e+00> : vector<4x8x8xf32>
    %89 = tpu.matmul %87, %88, %cst_24 {dimension_numbers = #tpu.dot_dimension_numbers<[2], [1], [1], [2], [0, 0, 0, 1, 1, 2], [0], [0]>} : vector<4x8x8xbf16>, vector<4x8x8xbf16>, vector<4x8x8xf32> -> vector<4x8x8xf32>
    "tpu.trace_stop"() : () -> ()
    %90 = vector.extract_strided_slice %89 {offsets = [0, 0, 0], sizes = [1, 8, 8], strides = [1, 1, 1]} : vector<4x8x8xf32> to vector<1x8x8xf32>
    %91 = vector.shape_cast %90 : vector<1x8x8xf32> to vector<8x8xf32>
    %92 = vector.extract_strided_slice %89 {offsets = [1, 0, 0], sizes = [1, 8, 8], strides = [1, 1, 1]} : vector<4x8x8xf32> to vector<1x8x8xf32>
    %93 = vector.shape_cast %92 : vector<1x8x8xf32> to vector<8x8xf32>
    %94 = vector.extract_strided_slice %89 {offsets = [2, 0, 0], sizes = [1, 8, 8], strides = [1, 1, 1]} : vector<4x8x8xf32> to vector<1x8x8xf32>
    %95 = vector.shape_cast %94 : vector<1x8x8xf32> to vector<8x8xf32>
    %96 = vector.extract_strided_slice %89 {offsets = [3, 0, 0], sizes = [1, 8, 8], strides = [1, 1, 1]} : vector<4x8x8xf32> to vector<1x8x8xf32>
    %97 = vector.shape_cast %96 : vector<1x8x8xf32> to vector<8x8xf32>
    %98 = tpu.concatenate %91, %93, %95, %97 in 1 : vector<8x8xf32>, vector<8x8xf32>, vector<8x8xf32>, vector<8x8xf32> -> vector<8x32xf32>
    %99 = arith.truncf %98 : vector<8x32xf32> to vector<8x32xbf16>
    %c0_25 = arith.constant 0 : index
    %c0_26 = arith.constant 0 : index
    %c0_27 = arith.constant 0 : index
    %100 = vector.load %arg7[%c0_25, %c0_26, %c0_27] : memref<1x32x32xbf16, #tpu.memory_space<vmem>>, vector<1x32x32xbf16>
    %101 = vector.shape_cast %100 : vector<1x32x32xbf16> to vector<32x32xbf16>
    %cst_28 = arith.constant dense<0.000000e+00> : vector<8x32xf32>
    %102 = tpu.matmul %99, %101, %cst_28 {dimension_numbers = #tpu.dot_dimension_numbers<[1], [0], [0], [1], [0, 0, 1, 1], [], []>} : vector<8x32xbf16>, vector<32x32xbf16>, vector<8x32xf32> -> vector<8x32xf32>
    %c0_29 = arith.constant 0 : index
    %c0_30 = arith.constant 0 : index
    %c0_31 = arith.constant 0 : index
    %103 = vector.load %arg8[%c0_29, %c0_30, %c0_31] : memref<1x1x32xf32, #tpu.memory_space<vmem>>, vector<1x1x32xf32>
    %104 = vector.shape_cast %103 : vector<1x1x32xf32> to vector<1x32xf32>
    %105 = vector.broadcast %104 : vector<1x32xf32> to vector<8x32xf32>
    %106 = arith.addf %102, %105 : vector<8x32xf32>
    %107 = arith.addf %29, %106 : vector<8x32xf32>
    %c0_32 = arith.constant 0 : index
    %c0_33 = arith.constant 0 : index
    %c0_34 = arith.constant 0 : index
    %108 = vector.load %arg9[%c0_32, %c0_33, %c0_34] : memref<1x1x32xf32, #tpu.memory_space<vmem>>, vector<1x1x32xf32>
    %109 = vector.shape_cast %108 : vector<1x1x32xf32> to vector<1x32xf32>
    %c0_35 = arith.constant 0 : index
    %c0_36 = arith.constant 0 : index
    %c0_37 = arith.constant 0 : index
    %110 = vector.load %arg10[%c0_35, %c0_36, %c0_37] : memref<1x1x32xf32, #tpu.memory_space<vmem>>, vector<1x1x32xf32>
    %111 = vector.shape_cast %110 : vector<1x1x32xf32> to vector<1x32xf32>
    %cst_38 = arith.constant dense<0.000000e+00> : vector<8xf32>
    %112 = vector.multi_reduction <add>, %107, %cst_38 [1] : vector<8x32xf32> to vector<8xf32>
    %113 = vector.shape_cast %112 : vector<8xf32> to vector<8x1xf32>
    %cst_39 = arith.constant 3.200000e+01 : f32
    %114 = vector.broadcast %cst_39 : f32 to vector<8x1xf32>
    %115 = arith.divf %113, %114 : vector<8x1xf32>
    %116 = vector.broadcast %115 : vector<8x1xf32> to vector<8x32xf32>
    %117 = arith.subf %107, %116 : vector<8x32xf32>
    %118 = arith.mulf %117, %117 : vector<8x32xf32>
    %cst_40 = arith.constant dense<0.000000e+00> : vector<8xf32>
    %119 = vector.multi_reduction <add>, %118, %cst_40 [1] : vector<8x32xf32> to vector<8xf32>
    %120 = vector.shape_cast %119 : vector<8xf32> to vector<8x1xf32>
    %cst_41 = arith.constant 3.200000e+01 : f32
    %121 = vector.broadcast %cst_41 : f32 to vector<8x1xf32>
    %122 = arith.divf %120, %121 : vector<8x1xf32>
    %123 = vector.broadcast %115 : vector<8x1xf32> to vector<8x32xf32>
    %124 = arith.subf %107, %123 : vector<8x32xf32>
    %cst_42 = arith.constant 9.99999974E-6 : f32
    %125 = vector.broadcast %cst_42 : f32 to vector<8x1xf32>
    %126 = arith.addf %122, %125 : vector<8x1xf32>
    %127 = math.rsqrt %126 : vector<8x1xf32>
    %128 = vector.broadcast %127 : vector<8x1xf32> to vector<8x32xf32>
    %129 = arith.mulf %124, %128 : vector<8x32xf32>
    %130 = vector.broadcast %109 : vector<1x32xf32> to vector<8x32xf32>
    %131 = arith.mulf %129, %130 : vector<8x32xf32>
    %132 = vector.broadcast %111 : vector<1x32xf32> to vector<8x32xf32>
    %133 = arith.addf %131, %132 : vector<8x32xf32>
    %134 = arith.truncf %133 : vector<8x32xf32> to vector<8x32xbf16>
    %c0_43 = arith.constant 0 : index
    %c0_44 = arith.constant 0 : index
    %c0_45 = arith.constant 0 : index
    %135 = vector.load %arg11[%c0_43, %c0_44, %c0_45] : memref<1x32x128xbf16, #tpu.memory_space<vmem>>, vector<1x32x128xbf16>
    %136 = vector.shape_cast %135 : vector<1x32x128xbf16> to vector<32x128xbf16>
    %cst_46 = arith.constant dense<0.000000e+00> : vector<8x128xf32>
    %137 = tpu.matmul %134, %136, %cst_46 {dimension_numbers = #tpu.dot_dimension_numbers<[1], [0], [0], [1], [0, 0, 1, 1], [], []>} : vector<8x32xbf16>, vector<32x128xbf16>, vector<8x128xf32> -> vector<8x128xf32>
    %c0_47 = arith.constant 0 : index
    %c0_48 = arith.constant 0 : index
    %c0_49 = arith.constant 0 : index
    %138 = vector.load %arg12[%c0_47, %c0_48, %c0_49] : memref<1x1x128xf32, #tpu.memory_space<vmem>>, vector<1x1x128xf32>
    %139 = vector.shape_cast %138 : vector<1x1x128xf32> to vector<1x128xf32>
    %140 = vector.broadcast %139 : vector<1x128xf32> to vector<8x128xf32>
    %141 = arith.addf %137, %140 : vector<8x128xf32>
    %cst_50 = arith.constant 0.000000e+00 : f32
    %142 = vector.broadcast %cst_50 : f32 to vector<8x128xf32>
    %143 = arith.maximumf %141, %142 : vector<8x128xf32>
    %144 = arith.truncf %143 : vector<8x128xf32> to vector<8x128xbf16>
    %c0_51 = arith.constant 0 : index
    %c0_52 = arith.constant 0 : index
    %c0_53 = arith.constant 0 : index
    %145 = vector.load %arg13[%c0_51, %c0_52, %c0_53] : memref<1x128x32xbf16, #tpu.memory_space<vmem>>, vector<1x128x32xbf16>
    %146 = vector.shape_cast %145 : vector<1x128x32xbf16> to vector<128x32xbf16>
    %cst_54 = arith.constant dense<0.000000e+00> : vector<8x32xf32>
    %147 = tpu.matmul %144, %146, %cst_54 {dimension_numbers = #tpu.dot_dimension_numbers<[1], [0], [0], [1], [0, 0, 1, 1], [], []>} : vector<8x128xbf16>, vector<128x32xbf16>, vector<8x32xf32> -> vector<8x32xf32>
    %c0_55 = arith.constant 0 : index
    %c0_56 = arith.constant 0 : index
    %c0_57 = arith.constant 0 : index
    %148 = vector.load %arg14[%c0_55, %c0_56, %c0_57] : memref<1x1x32xf32, #tpu.memory_space<vmem>>, vector<1x1x32xf32>
    %149 = vector.shape_cast %148 : vector<1x1x32xf32> to vector<1x32xf32>
    %150 = vector.broadcast %149 : vector<1x32xf32> to vector<8x32xf32>
    %151 = arith.addf %147, %150 : vector<8x32xf32>
    %152 = arith.addf %133, %151 : vector<8x32xf32>
    %c0_58 = arith.constant 0 : index
    %c0_59 = arith.constant 0 : index
    %153 = vector.load %arg20[%c0_58, %c0_59] : memref<8x32xf32, #tpu.memory_space<vmem>>, vector<8x32xf32>
    tpu.vector_store %arg20[%c0_58, %c0_59], %152 {strides = array<i32>} : memref<8x32xf32, #tpu.memory_space<vmem>>, vector<8x32xf32>,
    %c1_i32 = arith.constant 1 : i32
    %154 = arith.cmpi eq, %arg1, %c1_i32 : i32
    %155 = arith.extui %154 : i1 to i32
    %c0_i32_60 = arith.constant 0 : i32
    %156 = arith.cmpi ne, %155, %c0_i32_60 : i32
    scf.if %156 {
      %c0_61 = arith.constant 0 : index
      %c0_62 = arith.constant 0 : index
      %157 = vector.load %arg15[%c0_61, %c0_62] : memref<1x32xf32, #tpu.memory_space<vmem>>, vector<1x32xf32>
      %c0_63 = arith.constant 0 : index
      %c0_64 = arith.constant 0 : index
      %158 = vector.load %arg16[%c0_63, %c0_64] : memref<1x32xf32, #tpu.memory_space<vmem>>, vector<1x32xf32>
      %cst_65 = arith.constant dense<0.000000e+00> : vector<8xf32>
      %159 = vector.multi_reduction <add>, %152, %cst_65 [1] : vector<8x32xf32> to vector<8xf32>
      %160 = vector.shape_cast %159 : vector<8xf32> to vector<8x1xf32>
      %cst_66 = arith.constant 3.200000e+01 : f32
      %161 = vector.broadcast %cst_66 : f32 to vector<8x1xf32>
      %162 = arith.divf %160, %161 : vector<8x1xf32>
      %163 = vector.broadcast %162 : vector<8x1xf32> to vector<8x32xf32>
      %164 = arith.subf %152, %163 : vector<8x32xf32>
      %165 = arith.mulf %164, %164 : vector<8x32xf32>
      %cst_67 = arith.constant dense<0.000000e+00> : vector<8xf32>
      %166 = vector.multi_reduction <add>, %165, %cst_67 [1] : vector<8x32xf32> to vector<8xf32>
      %167 = vector.shape_cast %166 : vector<8xf32> to vector<8x1xf32>
      %cst_68 = arith.constant 3.200000e+01 : f32
      %168 = vector.broadcast %cst_68 : f32 to vector<8x1xf32>
      %169 = arith.divf %167, %168 : vector<8x1xf32>
      %170 = vector.broadcast %162 : vector<8x1xf32> to vector<8x32xf32>
      %171 = arith.subf %152, %170 : vector<8x32xf32>
      %cst_69 = arith.constant 9.99999974E-6 : f32
      %172 = vector.broadcast %cst_69 : f32 to vector<8x1xf32>
      %173 = arith.addf %169, %172 : vector<8x1xf32>
      %174 = math.rsqrt %173 : vector<8x1xf32>
      %175 = vector.broadcast %174 : vector<8x1xf32> to vector<8x32xf32>
      %176 = arith.mulf %171, %175 : vector<8x32xf32>
      %177 = vector.broadcast %157 : vector<1x32xf32> to vector<8x32xf32>
      %178 = arith.mulf %176, %177 : vector<8x32xf32>
      %179 = vector.broadcast %158 : vector<1x32xf32> to vector<8x32xf32>
      %180 = arith.addf %178, %179 : vector<8x32xf32>
      %181 = arith.truncf %180 : vector<8x32xf32> to vector<8x32xbf16>
      %c0_70 = arith.constant 0 : index
      %c0_71 = arith.constant 0 : index
      %182 = vector.load %arg17[%c0_70, %c0_71] : memref<32x128xbf16, #tpu.memory_space<vmem>>, vector<32x128xbf16>
      %cst_72 = arith.constant dense<0.000000e+00> : vector<8x128xf32>
      %183 = tpu.matmul %181, %182, %cst_72 {dimension_numbers = #tpu.dot_dimension_numbers<[1], [0], [0], [1], [0, 0, 1, 1], [], []>} : vector<8x32xbf16>, vector<32x128xbf16>, vector<8x128xf32> -> vector<8x128xf32>
      %c0_73 = arith.constant 0 : index
      %c0_74 = arith.constant 0 : index
      %184 = vector.load %arg18[%c0_73, %c0_74] : memref<1x128xf32, #tpu.memory_space<vmem>>, vector<1x128xf32>
      %185 = vector.broadcast %184 : vector<1x128xf32> to vector<8x128xf32>
      %186 = arith.addf %183, %185 : vector<8x128xf32>
      %c0_75 = arith.constant 0 : index
      %c0_76 = arith.constant 0 : index
      %c0_77 = arith.constant 0 : index
      %187 = vector.load %arg19[%c0_75, %c0_76, %c0_77] : memref<1x8x128xf32, #tpu.memory_space<vmem>>, vector<1x8x128xf32>
      %188 = vector.shape_cast %187 : vector<1x8x128xf32> to vector<8x128xf32>
      %189 = vector.shape_cast %186 : vector<8x128xf32> to vector<1x8x128xf32>
      tpu.vector_store %arg19[%c0_75, %c0_76, %c0_77], %189 {strides = array<i32>} : memref<1x8x128xf32, #tpu.memory_space<vmem>>, vector<1x8x128xf32>,
    } else {
    }
    return
  }
  func.func @transform_0(%arg0: i32, %arg1: i32) -> (i32, i32, i32) {
    %c0_i32 = arith.constant 0 : i32
    %c0_i32_0 = arith.constant 0 : i32
    %c0_i32_1 = arith.constant 0 : i32
    return %arg0, %c0_i32, %c0_i32_0 : i32, i32, i32
  }
  func.func @transform_1(%arg0: i32, %arg1: i32) -> (i32, i32, i32) {
    %c0_i32 = arith.constant 0 : i32
    %c0_i32_0 = arith.constant 0 : i32
    %c0_i32_1 = arith.constant 0 : i32
    return %arg1, %c0_i32, %c0_i32_0 : i32, i32, i32
  }
  func.func @transform_2(%arg0: i32, %arg1: i32) -> (i32, i32, i32) {
    %c0_i32 = arith.constant 0 : i32
    %c0_i32_0 = arith.constant 0 : i32
    %c0_i32_1 = arith.constant 0 : i32
    return %arg1, %c0_i32, %c0_i32_0 : i32, i32, i32
  }
  func.func @transform_3(%arg0: i32, %arg1: i32) -> (i32, i32, i32) {
    %c0_i32 = arith.constant 0 : i32
    %c0_i32_0 = arith.constant 0 : i32
    %c0_i32_1 = arith.constant 0 : i32
    return %arg1, %c0_i32, %c0_i32_0 : i32, i32, i32
  }
  func.func @transform_4(%arg0: i32, %arg1: i32) -> (i32, i32, i32) {
    %c0_i32 = arith.constant 0 : i32
    %c0_i32_0 = arith.constant 0 : i32
    %c0_i32_1 = arith.constant 0 : i32
    return %arg1, %c0_i32, %c0_i32_0 : i32, i32, i32
  }
  func.func @transform_5(%arg0: i32, %arg1: i32) -> (i32, i32, i32) {
    %c0_i32 = arith.constant 0 : i32
    %c0_i32_0 = arith.constant 0 : i32
    %c0_i32_1 = arith.constant 0 : i32
    return %arg1, %c0_i32, %c0_i32_0 : i32, i32, i32
  }
  func.func @transform_6(%arg0: i32, %arg1: i32) -> (i32, i32, i32) {
    %c0_i32 = arith.constant 0 : i32
    %c0_i32_0 = arith.constant 0 : i32
    %c0_i32_1 = arith.constant 0 : i32
    return %arg1, %c0_i32, %c0_i32_0 : i32, i32, i32
  }
  func.func @transform_7(%arg0: i32, %arg1: i32) -> (i32, i32, i32) {
    %c0_i32 = arith.constant 0 : i32
    %c0_i32_0 = arith.constant 0 : i32
    %c0_i32_1 = arith.constant 0 : i32
    return %arg1, %c0_i32, %c0_i32_0 : i32, i32, i32
  }
  func.func @transform_8(%arg0: i32, %arg1: i32) -> (i32, i32, i32) {
    %c0_i32 = arith.constant 0 : i32
    %c0_i32_0 = arith.constant 0 : i32
    %c0_i32_1 = arith.constant 0 : i32
    return %arg1, %c0_i32, %c0_i32_0 : i32, i32, i32
  }
  func.func @transform_9(%arg0: i32, %arg1: i32) -> (i32, i32, i32) {
    %c0_i32 = arith.constant 0 : i32
    %c0_i32_0 = arith.constant 0 : i32
    %c0_i32_1 = arith.constant 0 : i32
    return %arg1, %c0_i32, %c0_i32_0 : i32, i32, i32
  }
  func.func @transform_10(%arg0: i32, %arg1: i32) -> (i32, i32, i32) {
    %c0_i32 = arith.constant 0 : i32
    %c0_i32_0 = arith.constant 0 : i32
    %c0_i32_1 = arith.constant 0 : i32
    return %arg1, %c0_i32, %c0_i32_0 : i32, i32, i32
  }
  func.func @transform_11(%arg0: i32, %arg1: i32) -> (i32, i32, i32) {
    %c0_i32 = arith.constant 0 : i32
    %c0_i32_0 = arith.constant 0 : i32
    %c0_i32_1 = arith.constant 0 : i32
    return %arg1, %c0_i32, %c0_i32_0 : i32, i32, i32
  }
  func.func @transform_12(%arg0: i32, %arg1: i32) -> (i32, i32, i32) {
    %c0_i32 = arith.constant 0 : i32
    %c0_i32_0 = arith.constant 0 : i32
    %c0_i32_1 = arith.constant 0 : i32
    return %arg1, %c0_i32, %c0_i32_0 : i32, i32, i32
  }
  func.func @transform_13(%arg0: i32, %arg1: i32) -> (i32, i32) {
    %c0_i32 = arith.constant 0 : i32
    %c0_i32_0 = arith.constant 0 : i32
    %c0_i32_1 = arith.constant 0 : i32
    return %c0_i32, %c0_i32_0 : i32, i32
  }
  func.func @transform_14(%arg0: i32, %arg1: i32) -> (i32, i32) {
    %c0_i32 = arith.constant 0 : i32
    %c0_i32_0 = arith.constant 0 : i32
    %c0_i32_1 = arith.constant 0 : i32
    return %c0_i32, %c0_i32_0 : i32, i32
  }
  func.func @transform_15(%arg0: i32, %arg1: i32) -> (i32, i32) {
    %c0_i32 = arith.constant 0 : i32
    %c0_i32_0 = arith.constant 0 : i32
    %c0_i32_1 = arith.constant 0 : i32
    return %c0_i32, %c0_i32_0 : i32, i32
  }
  func.func @transform_16(%arg0: i32, %arg1: i32) -> (i32, i32) {
    %c0_i32 = arith.constant 0 : i32
    %c0_i32_0 = arith.constant 0 : i32
    %c0_i32_1 = arith.constant 0 : i32
    return %c0_i32, %c0_i32_0 : i32, i32
  }
  func.func @transform_17(%arg0: i32, %arg1: i32) -> (i32, i32, i32) {
    %c0_i32 = arith.constant 0 : i32
    %c0_i32_0 = arith.constant 0 : i32
    %c0_i32_1 = arith.constant 0 : i32
    return %arg0, %c0_i32, %c0_i32_0 : i32, i32, i32
  }
}

</mosaic_0001>

<llo_original>
// kernel: tpu_custom_call.1
$region0: #{tpu_custom_call.1}
  #allocation0 [shape = 'u32[]', space=smem, size = 0x4, offset = 0x4, fixed_abs, tag = 'smem constant byte address 0x4 - core index']
  #allocation1 [shape = 'u32[72,128]{1,0:T(1,128)}', space=vmem, size = 0x9000, scoped, tag = 'internal scratch']
  #allocation2 [shape = 'f32[8,32]{1,0:T(8,128)}', space=vmem, size = 0x1000, scoped, tag = 'scratch operand']
  %s0 = inlined_call_operand.vmem [shape: f32[2,8,32], index: 0, kind: input, shape index: {}]
  %s1 = inlined_call_operand.vmem [shape: f32[2,1,32], index: 1, kind: input, shape index: {}]
  %s2 = inlined_call_operand.vmem [shape: f32[2,1,32], index: 2, kind: input, shape index: {}]
  %s3 = inlined_call_operand.vmem [shape: bf16[2,32,96], index: 3, kind: input, shape index: {}]
  %s4 = inlined_call_operand.vmem [shape: f32[2,1,96], index: 4, kind: input, shape index: {}]
  %s5 = inlined_call_operand.vmem [shape: bf16[2,32,32], index: 5, kind: input, shape index: {}]
  %s6 = inlined_call_operand.vmem [shape: f32[2,1,32], index: 6, kind: input, shape index: {}]
  %s7 = inlined_call_operand.vmem [shape: f32[2,1,32], index: 7, kind: input, shape index: {}]
  %s8 = inlined_call_operand.vmem [shape: f32[2,1,32], index: 8, kind: input, shape index: {}]
  %s9 = inlined_call_operand.vmem [shape: bf16[2,32,128], index: 9, kind: input, shape index: {}]
  %s10 = inlined_call_operand.vmem [shape: f32[2,1,128], index: 10, kind: input, shape index: {}]
  %s11 = inlined_call_operand.vmem [shape: bf16[2,128,32], index: 11, kind: input, shape index: {}]
  %s12 = inlined_call_operand.vmem [shape: f32[2,1,32], index: 12, kind: input, shape index: {}]
  %s13 = inlined_call_operand.vmem [shape: f32[1,32], index: 13, kind: input, shape index: {}]
  %s14 = inlined_call_operand.vmem [shape: f32[1,32], index: 14, kind: input, shape index: {}]
  %s15 = inlined_call_operand.vmem [shape: bf16[32,128], index: 15, kind: input, shape index: {}]
  %s16 = inlined_call_operand.vmem [shape: f32[1,128], index: 16, kind: input, shape index: {}]
  %s17 = inlined_call_operand.hbm [shape: f32[2,8,128], index: 17, kind: output, shape index: {}]
  %s18 = sld [smem:[#allocation0]]
  $region109: #{tpu_custom_call.1} parent=0
    _
  %s20 = ssub.s32 1, %s18
  %s21 = scalar_select 0, %s20, %s18
  $region1: #{tpu_custom_call.1} parent=0
    #allocation3 [shape = 'u8[8192]{0}', space=vmem, size = 0x2000, scoped, tag = 'output window, operand 0']
    #allocation4 [shape = 's32[2]{0}', space=sflag, size = 0x8, scoped, tag = 'scoped memory for tpu_custom_call.1']
    %22 = vsyncpa [#allocation4], 0
    %s23 = scalar_lea.sflag [#allocation4], 1
    %24 = vsyncpa %s23, 0
    loop: start=0, step=1, limit=6
    $region2: #{tpu_custom_call.1} parent=1 // loop_pre_header
      _
    $region3: #{tpu_custom_call.1} parent=1 // loop_header
      %s26 = sphi 0, %s30
      %p27 = scmp.ge.s32.totalorder %s26, 6
      %s33 = sphi 0, %s45
      %s34 = sphi 0, %s41
      %s35 = sphi 0, %s33
      %s36 = sphi 0, %s34
      %s37 = sphi 0, %s35
      %s38 = sphi 0, %s36
      %s48 = sphi 0, %s50
      %s51 = sphi 0, %s48
      %s52 = sphi 0, %s51
      %s68 = sphi 0, %s52
      %s74 = sphi 0, %s76
      %s77 = sphi 0, %s74
      %s78 = sphi 0, %s77
      %s94 = sphi 0, %s78
      %s100 = sphi 0, %s102
      %s103 = sphi 0, %s100
      %s104 = sphi 0, %s103
      %s120 = sphi 0, %s104
      %s126 = sphi 0, %s128
      %s129 = sphi 0, %s126
      %s130 = sphi 0, %s129
      %s146 = sphi 0, %s130
      %s152 = sphi 0, %s154
      %s155 = sphi 0, %s152
      %s156 = sphi 0, %s155
      %s172 = sphi 0, %s156
      %s178 = sphi 0, %s180
      %s181 = sphi 0, %s178
      %s182 = sphi 0, %s181
      %s198 = sphi 0, %s182
      %s204 = sphi 0, %s206
      %s207 = sphi 0, %s204
      %s208 = sphi 0, %s207
      %s224 = sphi 0, %s208
      %s230 = sphi 0, %s232
      %s233 = sphi 0, %s230
      %s234 = sphi 0, %s233
      %s250 = sphi 0, %s234
      %s256 = sphi 0, %s258
      %s259 = sphi 0, %s256
      %s260 = sphi 0, %s259
      %s276 = sphi 0, %s260
      %s282 = sphi 0, %s284
      %s285 = sphi 0, %s282
      %s286 = sphi 0, %s285
      %s302 = sphi 0, %s286
      %s308 = sphi 0, %s310
      %s311 = sphi 0, %s308
      %s312 = sphi 0, %s311
      %s328 = sphi 0, %s312
      %s334 = sphi 0, %s336
      %s337 = sphi 0, %s334
      %s338 = sphi 0, %s337
      %s354 = sphi 0, %s338
      %s360 = sphi 0, %s362
      %s363 = sphi 0, %s360
      %s364 = sphi 0, %s363
      %s380 = sphi 0, %s364
      %s384 = sphi 0, %s384
      %s386 = sphi 0, %s384
      %s387 = sphi 0, %s386
      %s401 = sphi 0, %s387
      %s405 = sphi 0, %s405
      %s407 = sphi 0, %s405
      %s408 = sphi 0, %s407
      %s422 = sphi 0, %s408
      %s426 = sphi 0, %s426
      %s428 = sphi 0, %s426
      %s429 = sphi 0, %s428
      %s443 = sphi 0, %s429
      %s447 = sphi 0, %s447
      %s449 = sphi 0, %s447
      %s450 = sphi 0, %s449
      %s464 = sphi 0, %s450
      %s470 = sphi 0, %s472
      %s473 = sphi 0, %s470
      %s474 = sphi 0, %s473
      %s490 = sphi 0, %s474
    $region4: #{tpu_custom_call.1} parent=1 // loop_header_branch
      %29 = sbr.rel (%p27) target = $region8
    $region5: #{tpu_custom_call.1} parent=1 // loop_body
      %s31 = ssub.s32 %s26, 1
      %s32 = ssub.s32 %s26, 2
      %s39 = sadd.s32 1, %s34
      %p40 = scmp.ge.s32.totalorder %s39, 2
      %s41 = scalar_select %p40, 0, %s39
      %s42 = sadd.s32 1, %s33
      %s43 = scalar_select %p40, %s42, %s33
      %p44 = scmp.ge.s32.totalorder %s43, 2
      %s45 = scalar_select %p44, 0, %s43
      %s46 = ssub.s32 %s33, %s45
      %p47 = scmp.eq.s32.totalorder %s46, 0
      %s49 = sadd.s32 %s48, 1
      %s50 = scalar_select %p47, %s48, %s49
      %p53 = pneg %p47
      %p54 = scmp.eq.s32.totalorder %s26, 3
      %p55 = por %p53, %p54
      %p56 = scmp.ne.s32.totalorder %s48, %s51
      %p57 = scmp.eq.s32.totalorder %s26, 0
      %p58 = por %p56, %p57
      %p59 = scmp.ne.s32.totalorder %s48, %s51
      %p60 = scmp.eq.s32.totalorder %s31, 3
      %p61 = por %p59, %p60
      %p62 = scmp.ne.s32.totalorder %s51, %s52
      %p63 = scmp.eq.s32.totalorder %s31, 0
      %p64 = por %p62, %p63
      %p65 = scmp.ne.s32.totalorder %s51, %s52
      %p66 = scmp.eq.s32.totalorder %s32, 3
      %p67 = por %p65, %p66
      %p69 = scmp.ne.s32.totalorder %s52, %s68
      %p70 = scmp.eq.s32.totalorder %s32, 0
      %p71 = por %p69, %p70
      %s72 = ssub.s32 %s34, %s41
      %p73 = scmp.eq.s32.totalorder %s72, 0
      %s75 = sadd.s32 %s74, 1
      %s76 = scalar_select %p73, %s74, %s75
      %p79 = pneg %p73
      %p80 = scmp.eq.s32.totalorder %s26, 3
      %p81 = por %p79, %p80
      %p82 = scmp.ne.s32.totalorder %s74, %s77
      %p83 = scmp.eq.s32.totalorder %s26, 0
      %p84 = por %p82, %p83
      %p85 = scmp.ne.s32.totalorder %s74, %s77
      %p86 = scmp.eq.s32.totalorder %s31, 3
      %p87 = por %p85, %p86
      %p88 = scmp.ne.s32.totalorder %s77, %s78
      %p89 = scmp.eq.s32.totalorder %s31, 0
      %p90 = por %p88, %p89
      %p91 = scmp.ne.s32.totalorder %s77, %s78
      %p92 = scmp.eq.s32.totalorder %s32, 3
      %p93 = por %p91, %p92
      %p95 = scmp.ne.s32.totalorder %s78, %s94
      %p96 = scmp.eq.s32.totalorder %s32, 0
      %p97 = por %p95, %p96
      %s98 = ssub.s32 %s34, %s41
      %p99 = scmp.eq.s32.totalorder %s98, 0
      %s101 = sadd.s32 %s100, 1
      %s102 = scalar_select %p99, %s100, %s101
      %p105 = pneg %p99
      %p106 = scmp.eq.s32.totalorder %s26, 3
      %p107 = por %p105, %p106
      %p108 = scmp.ne.s32.totalorder %s100, %s103
      %p109 = scmp.eq.s32.totalorder %s26, 0
      %p110 = por %p108, %p109
      %p111 = scmp.ne.s32.totalorder %s100, %s103
      %p112 = scmp.eq.s32.totalorder %s31, 3
      %p113 = por %p111, %p112
      %p114 = scmp.ne.s32.totalorder %s103, %s104
      %p115 = scmp.eq.s32.totalorder %s31, 0
      %p116 = por %p114, %p115
      %p117 = scmp.ne.s32.totalorder %s103, %s104
      %p118 = scmp.eq.s32.totalorder %s32, 3
      %p119 = por %p117, %p118
      %p121 = scmp.ne.s32.totalorder %s104, %s120
      %p122 = scmp.eq.s32.totalorder %s32, 0
      %p123 = por %p121, %p122
      %s124 = ssub.s32 %s34, %s41
      %p125 = scmp.eq.s32.totalorder %s124, 0
      %s127 = sadd.s32 %s126, 1
      %s128 = scalar_select %p125, %s126, %s127
      %p131 = pneg %p125
      %p132 = scmp.eq.s32.totalorder %s26, 3
      %p133 = por %p131, %p132
      %p134 = scmp.ne.s32.totalorder %s126, %s129
      %p135 = scmp.eq.s32.totalorder %s26, 0
      %p136 = por %p134, %p135
      %p137 = scmp.ne.s32.totalorder %s126, %s129
      %p138 = scmp.eq.s32.totalorder %s31, 3
      %p139 = por %p137, %p138
      %p140 = scmp.ne.s32.totalorder %s129, %s130
      %p141 = scmp.eq.s32.totalorder %s31, 0
      %p142 = por %p140, %p141
      %p143 = scmp.ne.s32.totalorder %s129, %s130
      %p144 = scmp.eq.s32.totalorder %s32, 3
      %p145 = por %p143, %p144
      %p147 = scmp.ne.s32.totalorder %s130, %s146
      %p148 = scmp.eq.s32.totalorder %s32, 0
      %p149 = por %p147, %p148
      %s150 = ssub.s32 %s34, %s41
      %p151 = scmp.eq.s32.totalorder %s150, 0
      %s153 = sadd.s32 %s152, 1
      %s154 = scalar_select %p151, %s152, %s153
      %p157 = pneg %p151
      %p158 = scmp.eq.s32.totalorder %s26, 3
      %p159 = por %p157, %p158
      %p160 = scmp.ne.s32.totalorder %s152, %s155
      %p161 = scmp.eq.s32.totalorder %s26, 0
      %p162 = por %p160, %p161
      %p163 = scmp.ne.s32.totalorder %s152, %s155
      %p164 = scmp.eq.s32.totalorder %s31, 3
      %p165 = por %p163, %p164
      %p166 = scmp.ne.s32.totalorder %s155, %s156
      %p167 = scmp.eq.s32.totalorder %s31, 0
      %p168 = por %p166, %p167
      %p169 = scmp.ne.s32.totalorder %s155, %s156
      %p170 = scmp.eq.s32.totalorder %s32, 3
      %p171 = por %p169, %p170
      %p173 = scmp.ne.s32.totalorder %s156, %s172
      %p174 = scmp.eq.s32.totalorder %s32, 0
      %p175 = por %p173, %p174
      %s176 = ssub.s32 %s34, %s41
      %p177 = scmp.eq.s32.totalorder %s176, 0
      %s179 = sadd.s32 %s178, 1
      %s180 = scalar_select %p177, %s178, %s179
      %p183 = pneg %p177
      %p184 = scmp.eq.s32.totalorder %s26, 3
      %p185 = por %p183, %p184
      %p186 = scmp.ne.s32.totalorder %s178, %s181
      %p187 = scmp.eq.s32.totalorder %s26, 0
      %p188 = por %p186, %p187
      %p189 = scmp.ne.s32.totalorder %s178, %s181
      %p190 = scmp.eq.s32.totalorder %s31, 3
      %p191 = por %p189, %p190
      %p192 = scmp.ne.s32.totalorder %s181, %s182
      %p193 = scmp.eq.s32.totalorder %s31, 0
      %p194 = por %p192, %p193
      %p195 = scmp.ne.s32.totalorder %s181, %s182
      %p196 = scmp.eq.s32.totalorder %s32, 3
      %p197 = por %p195, %p196
      %p199 = scmp.ne.s32.totalorder %s182, %s198
      %p200 = scmp.eq.s32.totalorder %s32, 0
      %p201 = por %p199, %p200
      %s202 = ssub.s32 %s34, %s41
      %p203 = scmp.eq.s32.totalorder %s202, 0
      %s205 = sadd.s32 %s204, 1
      %s206 = scalar_select %p203, %s204, %s205
      %p209 = pneg %p203
      %p210 = scmp.eq.s32.totalorder %s26, 3
      %p211 = por %p209, %p210
      %p212 = scmp.ne.s32.totalorder %s204, %s207
      %p213 = scmp.eq.s32.totalorder %s26, 0
      %p214 = por %p212, %p213
      %p215 = scmp.ne.s32.totalorder %s204, %s207
      %p216 = scmp.eq.s32.totalorder %s31, 3
      %p217 = por %p215, %p216
      %p218 = scmp.ne.s32.totalorder %s207, %s208
      %p219 = scmp.eq.s32.totalorder %s31, 0
      %p220 = por %p218, %p219
      %p221 = scmp.ne.s32.totalorder %s207, %s208
      %p222 = scmp.eq.s32.totalorder %s32, 3
      %p223 = por %p221, %p222
      %p225 = scmp.ne.s32.totalorder %s208, %s224
      %p226 = scmp.eq.s32.totalorder %s32, 0
      %p227 = por %p225, %p226
      %s228 = ssub.s32 %s34, %s41
      %p229 = scmp.eq.s32.totalorder %s228, 0
      %s231 = sadd.s32 %s230, 1
      %s232 = scalar_select %p229, %s230, %s231
      %p235 = pneg %p229
      %p236 = scmp.eq.s32.totalorder %s26, 3
      %p237 = por %p235, %p236
      %p238 = scmp.ne.s32.totalorder %s230, %s233
      %p239 = scmp.eq.s32.totalorder %s26, 0
      %p240 = por %p238, %p239
      %p241 = scmp.ne.s32.totalorder %s230, %s233
      %p242 = scmp.eq.s32.totalorder %s31, 3
      %p243 = por %p241, %p242
      %p244 = scmp.ne.s32.totalorder %s233, %s234
      %p245 = scmp.eq.s32.totalorder %s31, 0
      %p246 = por %p244, %p245
      %p247 = scmp.ne.s32.totalorder %s233, %s234
      %p248 = scmp.eq.s32.totalorder %s32, 3
      %p249 = por %p247, %p248
      %p251 = scmp.ne.s32.totalorder %s234, %s250
      %p252 = scmp.eq.s32.totalorder %s32, 0
      %p253 = por %p251, %p252
      %s254 = ssub.s32 %s34, %s41
      %p255 = scmp.eq.s32.totalorder %s254, 0
      %s257 = sadd.s32 %s256, 1
      %s258 = scalar_select %p255, %s256, %s257
      %p261 = pneg %p255
      %p262 = scmp.eq.s32.totalorder %s26, 3
      %p263 = por %p261, %p262
      %p264 = scmp.ne.s32.totalorder %s256, %s259
      %p265 = scmp.eq.s32.totalorder %s26, 0
      %p266 = por %p264, %p265
      %p267 = scmp.ne.s32.totalorder %s256, %s259
      %p268 = scmp.eq.s32.totalorder %s31, 3
      %p269 = por %p267, %p268
      %p270 = scmp.ne.s32.totalorder %s259, %s260
      %p271 = scmp.eq.s32.totalorder %s31, 0
      %p272 = por %p270, %p271
      %p273 = scmp.ne.s32.totalorder %s259, %s260
      %p274 = scmp.eq.s32.totalorder %s32, 3
      %p275 = por %p273, %p274
      %p277 = scmp.ne.s32.totalorder %s260, %s276
      %p278 = scmp.eq.s32.totalorder %s32, 0
      %p279 = por %p277, %p278
      %s280 = ssub.s32 %s34, %s41
      %p281 = scmp.eq.s32.totalorder %s280, 0
      %s283 = sadd.s32 %s282, 1
      %s284 = scalar_select %p281, %s282, %s283
      %p287 = pneg %p281
      %p288 = scmp.eq.s32.totalorder %s26, 3
      %p289 = por %p287, %p288
      %p290 = scmp.ne.s32.totalorder %s282, %s285
      %p291 = scmp.eq.s32.totalorder %s26, 0
      %p292 = por %p290, %p291
      %p293 = scmp.ne.s32.totalorder %s282, %s285
      %p294 = scmp.eq.s32.totalorder %s31, 3
      %p295 = por %p293, %p294
      %p296 = scmp.ne.s32.totalorder %s285, %s286
      %p297 = scmp.eq.s32.totalorder %s31, 0
      %p298 = por %p296, %p297
      %p299 = scmp.ne.s32.totalorder %s285, %s286
      %p300 = scmp.eq.s32.totalorder %s32, 3
      %p301 = por %p299, %p300
      %p303 = scmp.ne.s32.totalorder %s286, %s302
      %p304 = scmp.eq.s32.totalorder %s32, 0
      %p305 = por %p303, %p304
      %s306 = ssub.s32 %s34, %s41
      %p307 = scmp.eq.s32.totalorder %s306, 0
      %s309 = sadd.s32 %s308, 1
      %s310 = scalar_select %p307, %s308, %s309
      %p313 = pneg %p307
      %p314 = scmp.eq.s32.totalorder %s26, 3
      %p315 = por %p313, %p314
      %p316 = scmp.ne.s32.totalorder %s308, %s311
      %p317 = scmp.eq.s32.totalorder %s26, 0
      %p318 = por %p316, %p317
      %p319 = scmp.ne.s32.totalorder %s308, %s311
      %p320 = scmp.eq.s32.totalorder %s31, 3
      %p321 = por %p319, %p320
      %p322 = scmp.ne.s32.totalorder %s311, %s312
      %p323 = scmp.eq.s32.totalorder %s31, 0
      %p324 = por %p322, %p323
      %p325 = scmp.ne.s32.totalorder %s311, %s312
      %p326 = scmp.eq.s32.totalorder %s32, 3
      %p327 = por %p325, %p326
      %p329 = scmp.ne.s32.totalorder %s312, %s328
      %p330 = scmp.eq.s32.totalorder %s32, 0
      %p331 = por %p329, %p330
      %s332 = ssub.s32 %s34, %s41
      %p333 = scmp.eq.s32.totalorder %s332, 0
      %s335 = sadd.s32 %s334, 1
      %s336 = scalar_select %p333, %s334, %s335
      %p339 = pneg %p333
      %p340 = scmp.eq.s32.totalorder %s26, 3
      %p341 = por %p339, %p340
      %p342 = scmp.ne.s32.totalorder %s334, %s337
      %p343 = scmp.eq.s32.totalorder %s26, 0
      %p344 = por %p342, %p343
      %p345 = scmp.ne.s32.totalorder %s334, %s337
      %p346 = scmp.eq.s32.totalorder %s31, 3
      %p347 = por %p345, %p346
      %p348 = scmp.ne.s32.totalorder %s337, %s338
      %p349 = scmp.eq.s32.totalorder %s31, 0
      %p350 = por %p348, %p349
      %p351 = scmp.ne.s32.totalorder %s337, %s338
      %p352 = scmp.eq.s32.totalorder %s32, 3
      %p353 = por %p351, %p352
      %p355 = scmp.ne.s32.totalorder %s338, %s354
      %p356 = scmp.eq.s32.totalorder %s32, 0
      %p357 = por %p355, %p356
      %s358 = ssub.s32 %s34, %s41
      %p359 = scmp.eq.s32.totalorder %s358, 0
      %s361 = sadd.s32 %s360, 1
      %s362 = scalar_select %p359, %s360, %s361
      %p365 = pneg %p359
      %p366 = scmp.eq.s32.totalorder %s26, 3
      %p367 = por %p365, %p366
      %p368 = scmp.ne.s32.totalorder %s360, %s363
      %p369 = scmp.eq.s32.totalorder %s26, 0
      %p370 = por %p368, %p369
      %p371 = scmp.ne.s32.totalorder %s360, %s363
      %p372 = scmp.eq.s32.totalorder %s31, 3
      %p373 = por %p371, %p372
      %p374 = scmp.ne.s32.totalorder %s363, %s364
      %p375 = scmp.eq.s32.totalorder %s31, 0
      %p376 = por %p374, %p375
      %p377 = scmp.ne.s32.totalorder %s363, %s364
      %p378 = scmp.eq.s32.totalorder %s32, 3
      %p379 = por %p377, %p378
      %p381 = scmp.ne.s32.totalorder %s364, %s380
      %p382 = scmp.eq.s32.totalorder %s32, 0
      %p383 = por %p381, %p382
      %s385 = sadd.s32 %s384, 1
      %p388 = scmp.eq.s32.totalorder %s26, 3
      %p389 = scmp.ne.s32.totalorder %s384, %s386
      %p390 = scmp.eq.s32.totalorder %s26, 0
      %p391 = por %p389, %p390
      %p392 = scmp.ne.s32.totalorder %s384, %s386
      %p393 = scmp.eq.s32.totalorder %s31, 3
      %p394 = por %p392, %p393
      %p395 = scmp.ne.s32.totalorder %s386, %s387
      %p396 = scmp.eq.s32.totalorder %s31, 0
      %p397 = por %p395, %p396
      %p398 = scmp.ne.s32.totalorder %s386, %s387
      %p399 = scmp.eq.s32.totalorder %s32, 3
      %p400 = por %p398, %p399
      %p402 = scmp.ne.s32.totalorder %s387, %s401
      %p403 = scmp.eq.s32.totalorder %s32, 0
      %p404 = por %p402, %p403
      %s406 = sadd.s32 %s405, 1
      %p409 = scmp.eq.s32.totalorder %s26, 3
      %p410 = scmp.ne.s32.totalorder %s405, %s407
      %p411 = scmp.eq.s32.totalorder %s26, 0
      %p412 = por %p410, %p411
      %p413 = scmp.ne.s32.totalorder %s405, %s407
      %p414 = scmp.eq.s32.totalorder %s31, 3
      %p415 = por %p413, %p414
      %p416 = scmp.ne.s32.totalorder %s407, %s408
      %p417 = scmp.eq.s32.totalorder %s31, 0
      %p418 = por %p416, %p417
      %p419 = scmp.ne.s32.totalorder %s407, %s408
      %p420 = scmp.eq.s32.totalorder %s32, 3
      %p421 = por %p419, %p420
      %p423 = scmp.ne.s32.totalorder %s408, %s422
      %p424 = scmp.eq.s32.totalorder %s32, 0
      %p425 = por %p423, %p424
      %s427 = sadd.s32 %s426, 1
      %p430 = scmp.eq.s32.totalorder %s26, 3
      %p431 = scmp.ne.s32.totalorder %s426, %s428
      %p432 = scmp.eq.s32.totalorder %s26, 0
      %p433 = por %p431, %p432
      %p434 = scmp.ne.s32.totalorder %s426, %s428
      %p435 = scmp.eq.s32.totalorder %s31, 3
      %p436 = por %p434, %p435
      %p437 = scmp.ne.s32.totalorder %s428, %s429
      %p438 = scmp.eq.s32.totalorder %s31, 0
      %p439 = por %p437, %p438
      %p440 = scmp.ne.s32.totalorder %s428, %s429
      %p441 = scmp.eq.s32.totalorder %s32, 3
      %p442 = por %p440, %p441
      %p444 = scmp.ne.s32.totalorder %s429, %s443
      %p445 = scmp.eq.s32.totalorder %s32, 0
      %p446 = por %p444, %p445
      %s448 = sadd.s32 %s447, 1
      %p451 = scmp.eq.s32.totalorder %s26, 3
      %p452 = scmp.ne.s32.totalorder %s447, %s449
      %p453 = scmp.eq.s32.totalorder %s26, 0
      %p454 = por %p452, %p453
      %p455 = scmp.ne.s32.totalorder %s447, %s449
      %p456 = scmp.eq.s32.totalorder %s31, 3
      %p457 = por %p455, %p456
      %p458 = scmp.ne.s32.totalorder %s449, %s450
      %p459 = scmp.eq.s32.totalorder %s31, 0
      %p460 = por %p458, %p459
      %p461 = scmp.ne.s32.totalorder %s449, %s450
      %p462 = scmp.eq.s32.totalorder %s32, 3
      %p463 = por %p461, %p462
      %p465 = scmp.ne.s32.totalorder %s450, %s464
      %p466 = scmp.eq.s32.totalorder %s32, 0
      %p467 = por %p465, %p466
      %s468 = ssub.s32 %s33, %s45
      %p469 = scmp.eq.s32.totalorder %s468, 0
      %s471 = sadd.s32 %s470, 1
      %s472 = scalar_select %p469, %s470, %s471
      %p475 = pneg %p469
      %p476 = scmp.eq.s32.totalorder %s26, 3
      %p477 = por %p475, %p476
      %p478 = scmp.ne.s32.totalorder %s470, %s473
      %p479 = scmp.eq.s32.totalorder %s26, 0
      %p480 = por %p478, %p479
      %p481 = scmp.ne.s32.totalorder %s470, %s473
      %p482 = scmp.eq.s32.totalorder %s31, 3
      %p483 = por %p481, %p482
      %p484 = scmp.ne.s32.totalorder %s473, %s474
      %p485 = scmp.eq.s32.totalorder %s31, 0
      %p486 = por %p484, %p485
      %p487 = scmp.ne.s32.totalorder %s473, %s474
      %p488 = scmp.eq.s32.totalorder %s32, 3
      %p489 = por %p487, %p488
      %p491 = scmp.ne.s32.totalorder %s474, %s490
      %p492 = scmp.eq.s32.totalorder %s32, 0
      %p493 = por %p491, %p492
      %p494 = scmp.le.s32.totalorder 1, %s26
      %p495 = scmp.lt.s32.totalorder %s26, 5
      %p496 = pnand %p494, %p495
      %p497 = pneg %p496
      // Predicated region
      $region9: #{tpu_custom_call.1} parent=5 // pred_check
        _
      $region10: #{tpu_custom_call.1} parent=5 // pred_check_branch
        %499 = sbr.rel (%p496) target = $region12
      $region11: #{tpu_custom_call.1} parent=5 // pred_region
        %s500 = ssub.s32 %s26, 1
        // Predicated region
        $region13: #{tpu_custom_call.1} parent=11 // pred_check
          %p501 = pneg %p397
        $region14: #{tpu_custom_call.1} parent=11 // pred_check_branch
          %503 = sbr.rel (%p501) target = $region16
        $region15: #{tpu_custom_call.1} parent=11 // pred_region
          _
        $region16: #{tpu_custom_call.1} parent=11 // pred_fallthru
          _
        // Predicated region
        $region17: #{tpu_custom_call.1} parent=11 // pred_check
          %p504 = pneg %p418
        $region18: #{tpu_custom_call.1} parent=11 // pred_check_branch
          %506 = sbr.rel (%p504) target = $region20
        $region19: #{tpu_custom_call.1} parent=11 // pred_region
          _
        $region20: #{tpu_custom_call.1} parent=11 // pred_fallthru
          _
        // Predicated region
        $region21: #{tpu_custom_call.1} parent=11 // pred_check
          %p507 = pneg %p439
        $region22: #{tpu_custom_call.1} parent=11 // pred_check_branch
          %509 = sbr.rel (%p507) target = $region24
        $region23: #{tpu_custom_call.1} parent=11 // pred_region
          _
        $region24: #{tpu_custom_call.1} parent=11 // pred_fallthru
          _
        // Predicated region
        $region25: #{tpu_custom_call.1} parent=11 // pred_check
          %p510 = pneg %p460
        $region26: #{tpu_custom_call.1} parent=11 // pred_check_branch
          %512 = sbr.rel (%p510) target = $region28
        $region27: #{tpu_custom_call.1} parent=11 // pred_region
          _
        $region28: #{tpu_custom_call.1} parent=11 // pred_fallthru
          _
      $region12: #{tpu_custom_call.1} parent=5 // pred_fallthru
        _
      %p513 = scmp.lt.s32.totalorder %s26, 4
      // Predicated region
      $region29: #{tpu_custom_call.1} parent=5 // pred_check
        %p514 = pneg %p513
      $region30: #{tpu_custom_call.1} parent=5 // pred_check_branch
        %516 = sbr.rel (%p514) target = $region32
      $region31: #{tpu_custom_call.1} parent=5 // pred_region
        // Predicated region
        $region33: #{tpu_custom_call.1} parent=31 // pred_check
          %p517 = pneg %p58
        $region34: #{tpu_custom_call.1} parent=31 // pred_check_branch
          %519 = sbr.rel (%p517) target = $region36
        $region35: #{tpu_custom_call.1} parent=31 // pred_region
          %p520 = scmp.lt.s32.totalorder %s33, 1
          %s521 = scalar_select %p520, %s33, 1
          %s522 = smul.addr %s521, 8
          %s523 = scalar_lea.vmem %s0, %s522
        $region36: #{tpu_custom_call.1} parent=31 // pred_fallthru
          _
        // Predicated region
        $region37: #{tpu_custom_call.1} parent=31 // pred_check
          %p524 = pneg %p84
        $region38: #{tpu_custom_call.1} parent=31 // pred_check_branch
          %526 = sbr.rel (%p524) target = $region40
        $region39: #{tpu_custom_call.1} parent=31 // pred_region
          %p527 = scmp.lt.s32.totalorder %s34, 1
          %s528 = scalar_select %p527, %s34, 1
          %s529 = scalar_lea.vmem %s1, %s528
        $region40: #{tpu_custom_call.1} parent=31 // pred_fallthru
          _
        // Predicated region
        $region41: #{tpu_custom_call.1} parent=31 // pred_check
          %p530 = pneg %p110
        $region42: #{tpu_custom_call.1} parent=31 // pred_check_branch
          %532 = sbr.rel (%p530) target = $region44
        $region43: #{tpu_custom_call.1} parent=31 // pred_region
          %p533 = scmp.lt.s32.totalorder %s34, 1
          %s534 = scalar_select %p533, %s34, 1
          %s535 = scalar_lea.vmem %s2, %s534
        $region44: #{tpu_custom_call.1} parent=31 // pred_fallthru
          _
        // Predicated region
        $region45: #{tpu_custom_call.1} parent=31 // pred_check
          %p536 = pneg %p136
        $region46: #{tpu_custom_call.1} parent=31 // pred_check_branch
          %538 = sbr.rel (%p536) target = $region48
        $region47: #{tpu_custom_call.1} parent=31 // pred_region
          %p539 = scmp.lt.s32.totalorder %s34, 1
          %s540 = scalar_select %p539, %s34, 1
          %s541 = smul.addr %s540, 4
          %s542 = smul.addr %s541, 4
          %s543 = scalar_lea.vmem %s3, %s542
        $region48: #{tpu_custom_call.1} parent=31 // pred_fallthru
          _
        // Predicated region
        $region49: #{tpu_custom_call.1} parent=31 // pred_check
          %p544 = pneg %p162
        $region50: #{tpu_custom_call.1} parent=31 // pred_check_branch
          %546 = sbr.rel (%p544) target = $region52
        $region51: #{tpu_custom_call.1} parent=31 // pred_region
          %p547 = scmp.lt.s32.totalorder %s34, 1
          %s548 = scalar_select %p547, %s34, 1
          %s549 = scalar_lea.vmem %s4, %s548
        $region52: #{tpu_custom_call.1} parent=31 // pred_fallthru
          _
        // Predicated region
        $region53: #{tpu_custom_call.1} parent=31 // pred_check
          %p550 = pneg %p188
        $region54: #{tpu_custom_call.1} parent=31 // pred_check_branch
          %552 = sbr.rel (%p550) target = $region56
        $region55: #{tpu_custom_call.1} parent=31 // pred_region
          %p553 = scmp.lt.s32.totalorder %s34, 1
          %s554 = scalar_select %p553, %s34, 1
          %s555 = smul.addr %s554, 4
          %s556 = smul.addr %s555, 4
          %s557 = scalar_lea.vmem %s5, %s556
        $region56: #{tpu_custom_call.1} parent=31 // pred_fallthru
          _
        // Predicated region
        $region57: #{tpu_custom_call.1} parent=31 // pred_check
          %p558 = pneg %p214
        $region58: #{tpu_custom_call.1} parent=31 // pred_check_branch
          %560 = sbr.rel (%p558) target = $region60
        $region59: #{tpu_custom_call.1} parent=31 // pred_region
          %p561 = scmp.lt.s32.totalorder %s34, 1
          %s562 = scalar_select %p561, %s34, 1
          %s563 = scalar_lea.vmem %s6, %s562
        $region60: #{tpu_custom_call.1} parent=31 // pred_fallthru
          _
        // Predicated region
        $region61: #{tpu_custom_call.1} parent=31 // pred_check
          %p564 = pneg %p240
        $region62: #{tpu_custom_call.1} parent=31 // pred_check_branch
          %566 = sbr.rel (%p564) target = $region64
        $region63: #{tpu_custom_call.1} parent=31 // pred_region
          %p567 = scmp.lt.s32.totalorder %s34, 1
          %s568 = scalar_select %p567, %s34, 1
          %s569 = scalar_lea.vmem %s7, %s568
        $region64: #{tpu_custom_call.1} parent=31 // pred_fallthru
          _
        // Predicated region
        $region65: #{tpu_custom_call.1} parent=31 // pred_check
          %p570 = pneg %p266
        $region66: #{tpu_custom_call.1} parent=31 // pred_check_branch
          %572 = sbr.rel (%p570) target = $region68
        $region67: #{tpu_custom_call.1} parent=31 // pred_region
          %p573 = scmp.lt.s32.totalorder %s34, 1
          %s574 = scalar_select %p573, %s34, 1
          %s575 = scalar_lea.vmem %s8, %s574
        $region68: #{tpu_custom_call.1} parent=31 // pred_fallthru
          _
        // Predicated region
        $region69: #{tpu_custom_call.1} parent=31 // pred_check
          %p576 = pneg %p292
        $region70: #{tpu_custom_call.1} parent=31 // pred_check_branch
          %578 = sbr.rel (%p576) target = $region72
        $region71: #{tpu_custom_call.1} parent=31 // pred_region
          %p579 = scmp.lt.s32.totalorder %s34, 1
          %s580 = scalar_select %p579, %s34, 1
          %s581 = smul.addr %s580, 4
          %s582 = smul.addr %s581, 4
          %s583 = scalar_lea.vmem %s9, %s582
        $region72: #{tpu_custom_call.1} parent=31 // pred_fallthru
          _
        // Predicated region
        $region73: #{tpu_custom_call.1} parent=31 // pred_check
          %p584 = pneg %p318
        $region74: #{tpu_custom_call.1} parent=31 // pred_check_branch
          %586 = sbr.rel (%p584) target = $region76
        $region75: #{tpu_custom_call.1} parent=31 // pred_region
          %p587 = scmp.lt.s32.totalorder %s34, 1
          %s588 = scalar_select %p587, %s34, 1
          %s589 = scalar_lea.vmem %s10, %s588
        $region76: #{tpu_custom_call.1} parent=31 // pred_fallthru
          _
        // Predicated region
        $region77: #{tpu_custom_call.1} parent=31 // pred_check
          %p590 = pneg %p344
        $region78: #{tpu_custom_call.1} parent=31 // pred_check_branch
          %592 = sbr.rel (%p590) target = $region80
        $region79: #{tpu_custom_call.1} parent=31 // pred_region
          %p593 = scmp.lt.s32.totalorder %s34, 1
          %s594 = scalar_select %p593, %s34, 1
          %s595 = smul.addr %s594, 16
          %s596 = smul.addr %s595, 4
          %s597 = scalar_lea.vmem %s11, %s596
        $region80: #{tpu_custom_call.1} parent=31 // pred_fallthru
          _
        // Predicated region
        $region81: #{tpu_custom_call.1} parent=31 // pred_check
          %p598 = pneg %p370
        $region82: #{tpu_custom_call.1} parent=31 // pred_check_branch
          %600 = sbr.rel (%p598) target = $region84
        $region83: #{tpu_custom_call.1} parent=31 // pred_region
          %p601 = scmp.lt.s32.totalorder %s34, 1
          %s602 = scalar_select %p601, %s34, 1
          %s603 = scalar_lea.vmem %s12, %s602
        $region84: #{tpu_custom_call.1} parent=31 // pred_fallthru
          _
      $region32: #{tpu_custom_call.1} parent=5 // pred_fallthru
        _
      %p604 = scmp.le.s32.totalorder 1, %s26
      %p605 = scmp.lt.s32.totalorder %s26, 5
      %p606 = pnand %p604, %p605
      %p607 = pneg %p606
      // Predicated region
      $region85: #{tpu_custom_call.1} parent=5 // pred_check
        _
      $region86: #{tpu_custom_call.1} parent=5 // pred_check_branch
        %609 = sbr.rel (%p606) target = $region88
      $region87: #{tpu_custom_call.1} parent=5 // pred_region
        %s610 = ssub.s32 %s26, 1
        %p611 = scmp.lt.s32.totalorder %s35, 1
        %s612 = scalar_select %p611, %s35, 1
        %s613 = smul.addr %s612, 8
        %s614 = scalar_lea.vmem %s0, %s613
        %p615 = pneg %p64
        %p616 = pneg %p61
        %p617 = scmp.lt.s32.totalorder %s36, 1
        %s618 = scalar_select %p617, %s36, 1
        %s619 = scalar_lea.vmem %s1, %s618
        %p620 = pneg %p90
        %p621 = pneg %p87
        %p622 = scmp.lt.s32.totalorder %s36, 1
        %s623 = scalar_select %p622, %s36, 1
        %s624 = scalar_lea.vmem %s2, %s623
        %p625 = pneg %p116
        %p626 = pneg %p113
        %p627 = scmp.lt.s32.totalorder %s36, 1
        %s628 = scalar_select %p627, %s36, 1
        %s629 = smul.addr %s628, 4
        %s630 = smul.addr %s629, 4
        %s631 = scalar_lea.vmem %s3, %s630
        %p632 = pneg %p142
        %p633 = pneg %p139
        %p634 = scmp.lt.s32.totalorder %s36, 1
        %s635 = scalar_select %p634, %s36, 1
        %s636 = scalar_lea.vmem %s4, %s635
        %p637 = pneg %p168
        %p638 = pneg %p165
        %p639 = scmp.lt.s32.totalorder %s36, 1
        %s640 = scalar_select %p639, %s36, 1
        %s641 = smul.addr %s640, 4
        %s642 = smul.addr %s641, 4
        %s643 = scalar_lea.vmem %s5, %s642
        %p644 = pneg %p194
        %p645 = pneg %p191
        %p646 = scmp.lt.s32.totalorder %s36, 1
        %s647 = scalar_select %p646, %s36, 1
        %s648 = scalar_lea.vmem %s6, %s647
        %p649 = pneg %p220
        %p650 = pneg %p217
        %p651 = scmp.lt.s32.totalorder %s36, 1
        %s652 = scalar_select %p651, %s36, 1
        %s653 = scalar_lea.vmem %s7, %s652
        %p654 = pneg %p246
        %p655 = pneg %p243
        %p656 = scmp.lt.s32.totalorder %s36, 1
        %s657 = scalar_select %p656, %s36, 1
        %s658 = scalar_lea.vmem %s8, %s657
        %p659 = pneg %p272
        %p660 = pneg %p269
        %p661 = scmp.lt.s32.totalorder %s36, 1
        %s662 = scalar_select %p661, %s36, 1
        %s663 = smul.addr %s662, 4
        %s664 = smul.addr %s663, 4
        %s665 = scalar_lea.vmem %s9, %s664
        %p666 = pneg %p298
        %p667 = pneg %p295
        %p668 = scmp.lt.s32.totalorder %s36, 1
        %s669 = scalar_select %p668, %s36, 1
        %s670 = scalar_lea.vmem %s10, %s669
        %p671 = pneg %p324
        %p672 = pneg %p321
        %p673 = scmp.lt.s32.totalorder %s36, 1
        %s674 = scalar_select %p673, %s36, 1
        %s675 = smul.addr %s674, 16
        %s676 = smul.addr %s675, 4
        %s677 = scalar_lea.vmem %s11, %s676
        %p678 = pneg %p350
        %p679 = pneg %p347
        %p680 = scmp.lt.s32.totalorder %s36, 1
        %s681 = scalar_select %p680, %s36, 1
        %s682 = scalar_lea.vmem %s12, %s681
        %p683 = pneg %p376
        %p684 = pneg %p373
        %p685 = pneg %p397
        %p686 = pneg %p394
        %p687 = pneg %p418
        %p688 = pneg %p415
        %p689 = pneg %p439
        %p690 = pneg %p436
        %p691 = pneg %p460
        %p692 = pneg %p457
        %p693 = pneg %p486
        %p694 = pneg %p483
        %s695 = sand.u32 %s473, 1
        %s696 = scalar_lea.sflag [#allocation4], %s695
        %s697 = sand.u32 %s473, 1
        %s698 = smul.addr %s697, 8
        %s699 = scalar_lea.vmem [#allocation3], %s698
        %p700 = scmp.lt.s32.totalorder %s35, 1
        %s701 = scalar_select %p700, %s35, 1
        %s702 = smul.addr %s701, 8
        %s703 = scalar_lea.vmem %s0, %s702
        %p704 = scmp.lt.s32.totalorder %s36, 1
        %s705 = scalar_select %p704, %s36, 1
        %s706 = scalar_lea.vmem %s1, %s705
        %p707 = scmp.lt.s32.totalorder %s36, 1
        %s708 = scalar_select %p707, %s36, 1
        %s709 = scalar_lea.vmem %s2, %s708
        %p710 = scmp.lt.s32.totalorder %s36, 1
        %s711 = scalar_select %p710, %s36, 1
        %s712 = smul.addr %s711, 4
        %s713 = smul.addr %s712, 4
        %s714 = scalar_lea.vmem %s3, %s713
        %p715 = scmp.lt.s32.totalorder %s36, 1
        %s716 = scalar_select %p715, %s36, 1
        %s717 = scalar_lea.vmem %s4, %s716
        %p718 = scmp.lt.s32.totalorder %s36, 1
        %s719 = scalar_select %p718, %s36, 1
        %s720 = smul.addr %s719, 4
        %s721 = smul.addr %s720, 4
        %s722 = scalar_lea.vmem %s5, %s721
        %p723 = scmp.lt.s32.totalorder %s36, 1
        %s724 = scalar_select %p723, %s36, 1
        %s725 = scalar_lea.vmem %s6, %s724
        %p726 = scmp.lt.s32.totalorder %s36, 1
        %s727 = scalar_select %p726, %s36, 1
        %s728 = scalar_lea.vmem %s7, %s727
        %p729 = scmp.lt.s32.totalorder %s36, 1
        %s730 = scalar_select %p729, %s36, 1
        %s731 = scalar_lea.vmem %s8, %s730
        %p732 = scmp.lt.s32.totalorder %s36, 1
        %s733 = scalar_select %p732, %s36, 1
        %s734 = smul.addr %s733, 4
        %s735 = smul.addr %s734, 4
        %s736 = scalar_lea.vmem %s9, %s735
        %p737 = scmp.lt.s32.totalorder %s36, 1
        %s738 = scalar_select %p737, %s36, 1
        %s739 = scalar_lea.vmem %s10, %s738
        %p740 = scmp.lt.s32.totalorder %s36, 1
        %s741 = scalar_select %p740, %s36, 1
        %s742 = smul.addr %s741, 16
        %s743 = smul.addr %s742, 4
        %s744 = scalar_lea.vmem %s11, %s743
        %p745 = scmp.lt.s32.totalorder %s36, 1
        %s746 = scalar_select %p745, %s36, 1
        %s747 = scalar_lea.vmem %s12, %s746
        %p749 = scmp.eq.s32.totalorder %s36, 0
        // Predicated region
        $region89: #{tpu_custom_call.1} parent=87 // pred_check
          %p750 = pneg %p749
        $region90: #{tpu_custom_call.1} parent=87 // pred_check_branch
          %752 = sbr.rel (%p750) target = $region92
        $region91: #{tpu_custom_call.1} parent=87 // pred_region
          %v753 = vld [vmem:[%s703] sm:$0xff]
          %vm754 = vcmask 261120
          %755 = vst.msk [vmem:[#allocation2] sm:$0xff] %vm754, %v753
        $region92: #{tpu_custom_call.1} parent=87 // pred_fallthru
          _
        %v756 = vld [vmem:[#allocation2] sm:$0xff]
        %v757 = vld [vmem:[%s706] sm:$0x1]
        %v758 = vld [vmem:[%s709] sm:$0x1]
        %vm759 = vcmask 261120
        %v760 = vsel %vm759, %v756, 0.0
        %761 = vadd.xlane.f32.xlu0 %v760
        %v762 = vpop.xlane.xlu0 %761
        %v763 = vrcp.pop 32.0
        %v764 = vmul.f32 32.0, %v763
        %v765 = vsub.f32 1.0, %v764
        %v766 = vmul.f32 %v763, %v765
        %v767 = vadd.f32 %v763, %v766
        %vm768 = vweird.f32 %v763
        %v769 = vsel %vm768, %v763, %v767
        %v770 = vmul.f32 %v762, %v769
        %v771 = vsub.f32 %v756, %v770
        %v772 = vmul.f32 %v771, %v771
        %v773 = vsel %vm759, %v772, 0.0
        %774 = vadd.xlane.f32.xlu0 %v773
        %v775 = vpop.xlane.xlu0 %774
        %v776 = vmul.f32 %v775, %v769
        %v777 = vadd.f32 %v776, 1e-05
        %v778 = vrsqrt.pop %v777
        %v779 = vmul.f32 %v778, %v777
        %v780 = vmul.f32 %v779, %v778
        %v781 = vmul.f32 0.5, %v780
        %v782 = vsub.f32 1.5, %v781
        %v783 = vmul.f32 %v778, %v782
        %vm784 = vweird.f32 %v777
        %vm785 = vweird.f32 %v778
        %vm786 = vmor %vm784, %vm785
        %v787 = vsel %vm786, %v778, %v783
        %v788 = vmul.f32 %v771, %v787
        %v790 = vperm.slane %v757, 0
        %v792 = vmul.f32 %v788, %v790
        %v794 = vperm.slane %v758, 0
        %v796 = vadd.f32 %v792, %v794
        %v797 = vpack.c.bf16 %v796, %v796
        %v798 = vld [vmem:[%s714] sm:$0xf]
        %v799 = vld [vmem:[%s714 + $0x4] sm:$0xf]
        %v800 = vld [vmem:[%s714 + $0x8] sm:$0xf]
        %v801 = vld [vmem:[%s714 + $0xc] sm:$0xf]
        %v802 = vld [vmem:[%s717] sm:$0x1]
        %v804 = vperm.slane %v802, 0
        %v810 = vunpack.c.l.b16 %v798
        %v811 = vunpack.c.l.b16 %v799
        %v812 = vunpack.c.l.b16 %v800
        %v813 = vunpack.c.l.b16 %v801
        %v814 = vpack.c.b16 %v811, %v810
        %v815 = vpack.c.b16 %v813, %v812
        %v819 = vsel %vm759, %v797, 0
        %821 = vmatpush.bf16.msra.mxu0 0
        %822 = vmatpush.bf16.msra.mxu0 0
        %823 = vmatpush.bf16.msra.mxu0 0
        %824 = vmatpush.bf16.msra.mxu0 0
        %825 = vmatpush.bf16.msra.mxu0 0
        %826 = vmatpush.bf16.msra.mxu0 0
        %827 = vmatpush.bf16.msra.mxu0 %v815
        %828 = vmatpush.bf16.msra.mxu0 %v814
        %829 = vmatmul.bf16.gmra.mxu0 %v819
        %v830 = vpop.f32.mrf.mxu0
        %v831 = vadd.f32 %v804, %v830
        %v832 = vpop.f32.mrf.mxu0
        %833 = vdwg.mxu0
        %835 = vrot.lane.b32.xlu0 %v831, 120
        %v836 = vpop.permute.xlu0 %835
        %838 = vrot.lane.b32.xlu0 %v831, 112
        %v839 = vpop.permute.xlu0 %838
        %841 = vrot.lane.b32.xlu0 %v831, 104
        %v842 = vpop.permute.xlu0 %841
        %v844 = vpack.c.bf16 %v831, %v831
        %v845 = vpack.c.bf16 %v836, %v836
        %v846 = vpack.c.bf16 %v839, %v839
        %v847 = vpack.c.bf16 %v842, %v842
        %v848 = vlaneseq
        %v849 = vshrl.u32 %v848, 7
        %v850 = vlaneseq
        %v851 = vand.u32 %v850, 127
        %vm852 = vcmp.le.s32.totalorder %v851, %v849
        %v853 = vsel %vm852, 0.0, -1e+30
        %v855 = vunpack.c.l.b16 %v844
        %v856 = vpack.c.b16 %v855, %v855
        %857 = vrot.lane.b32.xlu0 %v856, 96
        %v858 = vpop.permute.xlu0 %857
        %vm859 = vcmask 64512
        %v861 = vsel %vm859, %v844, 0
        %v864 = vsel %vm859, %v858, 0
        %866 = vmatpush.bf16.xpose.msra.mxu0 0
        %867 = vmatpush.bf16.xpose.msra.mxu0 0
        %868 = vmatpush.bf16.xpose.msra.mxu0 0
        %869 = vmatpush.bf16.xpose.msra.mxu0 0
        %870 = vmatpush.bf16.xpose.msra.mxu0 0
        %871 = vmatpush.bf16.xpose.msra.mxu0 0
        %872 = vmatpush.bf16.xpose.msra.mxu0 0
        %873 = vmatpush.bf16.xpose.msra.mxu0 %v864
        %874 = vmatmul.bf16.gmra.mxu0 %v861
        %v875 = vpop.f32.mrf.mxu0
        %v876 = vadd.f32 %v853, %v875
        %v877 = vpop.f32.mrf.mxu0
        %878 = vdwg.mxu0
        %v880 = vunpack.c.l.b16 %v845
        %v881 = vpack.c.b16 %v880, %v880
        %882 = vrot.lane.b32.xlu0 %v881, 96
        %v883 = vpop.permute.xlu0 %882
        %v885 = vsel %vm859, %v845, 0
        %v888 = vsel %vm859, %v883, 0
        %890 = vmatpush.bf16.xpose.msra.mxu0 0
        %891 = vmatpush.bf16.xpose.msra.mxu0 0
        %892 = vmatpush.bf16.xpose.msra.mxu0 0
        %893 = vmatpush.bf16.xpose.msra.mxu0 0
        %894 = vmatpush.bf16.xpose.msra.mxu0 0
        %895 = vmatpush.bf16.xpose.msra.mxu0 0
        %896 = vmatpush.bf16.xpose.msra.mxu0 0
        %897 = vmatpush.bf16.xpose.msra.mxu0 %v888
        %898 = vmatmul.bf16.gmra.mxu0 %v885
        %v899 = vpop.f32.mrf.mxu0
        %v900 = vadd.f32 %v853, %v899
        %v901 = vpop.f32.mrf.mxu0
        %902 = vdwg.mxu0
        %v904 = vunpack.c.l.b16 %v846
        %v905 = vpack.c.b16 %v904, %v904
        %906 = vrot.lane.b32.xlu0 %v905, 96
        %v907 = vpop.permute.xlu0 %906
        %v909 = vsel %vm859, %v846, 0
        %v912 = vsel %vm859, %v907, 0
        %914 = vmatpush.bf16.xpose.msra.mxu0 0
        %915 = vmatpush.bf16.xpose.msra.mxu0 0
        %916 = vmatpush.bf16.xpose.msra.mxu0 0
        %917 = vmatpush.bf16.xpose.msra.mxu0 0
        %918 = vmatpush.bf16.xpose.msra.mxu0 0
        %919 = vmatpush.bf16.xpose.msra.mxu0 0
        %920 = vmatpush.bf16.xpose.msra.mxu0 0
        %921 = vmatpush.bf16.xpose.msra.mxu0 %v912
        %922 = vmatmul.bf16.gmra.mxu0 %v909
        %v923 = vpop.f32.mrf.mxu0
        %v924 = vadd.f32 %v853, %v923
        %v925 = vpop.f32.mrf.mxu0
        %926 = vdwg.mxu0
        %v928 = vunpack.c.l.b16 %v847
        %v929 = vpack.c.b16 %v928, %v928
        %930 = vrot.lane.b32.xlu0 %v929, 96
        %v931 = vpop.permute.xlu0 %930
        %v933 = vsel %vm859, %v847, 0
        %v936 = vsel %vm859, %v931, 0
        %938 = vmatpush.bf16.xpose.msra.mxu0 0
        %939 = vmatpush.bf16.xpose.msra.mxu0 0
        %940 = vmatpush.bf16.xpose.msra.mxu0 0
        %941 = vmatpush.bf16.xpose.msra.mxu0 0
        %942 = vmatpush.bf16.xpose.msra.mxu0 0
        %943 = vmatpush.bf16.xpose.msra.mxu0 0
        %944 = vmatpush.bf16.xpose.msra.mxu0 0
        %945 = vmatpush.bf16.xpose.msra.mxu0 %v936
        %946 = vmatmul.bf16.gmra.mxu0 %v933
        %v947 = vpop.f32.mrf.mxu0
        %v948 = vadd.f32 %v853, %v947
        %v949 = vpop.f32.mrf.mxu0
        %950 = vdwg.mxu0
        %v951 = vsel %vm859, %v876, -inf
        %952 = vmax.xlane.f32.xlu0 %v951
        %v953 = vpop.xlane.xlu0 %952
        %v954 = vsel %vm859, %v900, -inf
        %955 = vmax.xlane.f32.xlu0 %v954
        %v956 = vpop.xlane.xlu0 %955
        %v957 = vsel %vm859, %v924, -inf
        %958 = vmax.xlane.f32.xlu0 %v957
        %v959 = vpop.xlane.xlu0 %958
        %v960 = vsel %vm859, %v948, -inf
        %961 = vmax.xlane.f32.xlu0 %v960
        %v962 = vpop.xlane.xlu0 %961
        %v963 = vsub.f32 %v876, %v953
        %v964 = vsub.f32 %v900, %v956
        %v965 = vsub.f32 %v924, %v959
        %v966 = vsub.f32 %v948, %v962
        %v967 = vmul.f32 %v963, 1.442695
        %v968 = vpow.pop %v967
        %v969 = vmul.f32 %v964, 1.442695
        %v970 = vpow.pop %v969
        %v971 = vmul.f32 %v965, 1.442695
        %v972 = vpow.pop %v971
        %v973 = vmul.f32 %v966, 1.442695
        %v974 = vpow.pop %v973
        %v975 = vsel %vm859, %v968, 0.0
        %976 = vadd.xlane.f32.xlu0 %v975
        %v977 = vpop.xlane.xlu0 %976
        %v978 = vsel %vm859, %v970, 0.0
        %979 = vadd.xlane.f32.xlu0 %v978
        %v980 = vpop.xlane.xlu0 %979
        %v981 = vsel %vm859, %v972, 0.0
        %982 = vadd.xlane.f32.xlu0 %v981
        %v983 = vpop.xlane.xlu0 %982
        %v984 = vsel %vm859, %v974, 0.0
        %985 = vadd.xlane.f32.xlu0 %v984
        %v986 = vpop.xlane.xlu0 %985
        %v987 = vrcp.pop %v977
        %v988 = vmul.f32 %v977, %v987
        %v989 = vsub.f32 1.0, %v988
        %v990 = vmul.f32 %v987, %v989
        %v991 = vadd.f32 %v987, %v990
        %vm992 = vweird.f32 %v977
        %vm993 = vweird.f32 %v987
        %vm994 = vmor %vm992, %vm993
        %v995 = vsel %vm994, %v987, %v991
        %v996 = vand.u32 2147483647, %v977
        %vm997 = vcmp.eq.f32.partialorder %v996, 8.507059e+37
        %v998 = vand.u32 %v977, 2147483648
        %v999 = vor.u32 1.1754944e-38, %v998
        %v1000 = vsel %vm997, %v999, %v995
        %v1001 = vrcp.pop %v980
        %v1002 = vmul.f32 %v980, %v1001
        %v1003 = vsub.f32 1.0, %v1002
        %v1004 = vmul.f32 %v1001, %v1003
        %v1005 = vadd.f32 %v1001, %v1004
        %vm1006 = vweird.f32 %v980
        %vm1007 = vweird.f32 %v1001
        %vm1008 = vmor %vm1006, %vm1007
        %v1009 = vsel %vm1008, %v1001, %v1005
        %v1010 = vand.u32 2147483647, %v980
        %vm1011 = vcmp.eq.f32.partialorder %v1010, 8.507059e+37
        %v1012 = vand.u32 %v980, 2147483648
        %v1013 = vor.u32 1.1754944e-38, %v1012
        %v1014 = vsel %vm1011, %v1013, %v1009
        %v1015 = vrcp.pop %v983
        %v1016 = vmul.f32 %v983, %v1015
        %v1017 = vsub.f32 1.0, %v1016
        %v1018 = vmul.f32 %v1015, %v1017
        %v1019 = vadd.f32 %v1015, %v1018
        %vm1020 = vweird.f32 %v983
        %vm1021 = vweird.f32 %v1015
        %vm1022 = vmor %vm1020, %vm1021
        %v1023 = vsel %vm1022, %v1015, %v1019
        %v1024 = vand.u32 2147483647, %v983
        %vm1025 = vcmp.eq.f32.partialorder %v1024, 8.507059e+37
        %v1026 = vand.u32 %v983, 2147483648
        %v1027 = vor.u32 1.1754944e-38, %v1026
        %v1028 = vsel %vm1025, %v1027, %v1023
        %v1029 = vrcp.pop %v986
        %v1030 = vmul.f32 %v986, %v1029
        %v1031 = vsub.f32 1.0, %v1030
        %v1032 = vmul.f32 %v1029, %v1031
        %v1033 = vadd.f32 %v1029, %v1032
        %vm1034 = vweird.f32 %v986
        %vm1035 = vweird.f32 %v1029
        %vm1036 = vmor %vm1034, %vm1035
        %v1037 = vsel %vm1036, %v1029, %v1033
        %v1038 = vand.u32 2147483647, %v986
        %vm1039 = vcmp.eq.f32.partialorder %v1038, 8.507059e+37
        %v1040 = vand.u32 %v986, 2147483648
        %v1041 = vor.u32 1.1754944e-38, %v1040
        %v1042 = vsel %vm1039, %v1041, %v1037
        %v1043 = vmul.f32 %v968, %v1000
        %v1044 = vmul.f32 %v970, %v1014
        %v1045 = vmul.f32 %v972, %v1028
        %v1046 = vmul.f32 %v974, %v1042
        %v1047 = vpack.c.bf16 %v1043, %v1043
        %v1048 = vpack.c.bf16 %v1044, %v1044
        %v1049 = vpack.c.bf16 %v1045, %v1045
        %v1050 = vpack.c.bf16 %v1046, %v1046
        %1051 = vrot.lane.b32.xlu0 %v856, 64
        %v1052 = vpop.permute.xlu0 %1051
        %v1054 = vsel %vm859, %v1047, 0
        %vm1056 = vcmask 1043456
        %v1058 = vsel %vm1056, %v1052, 0
        %1060 = vmatpush.bf16.msra.mxu0 0
        %1061 = vmatpush.bf16.msra.mxu0 0
        %1062 = vmatpush.bf16.msra.mxu0 0
        %1063 = vmatpush.bf16.msra.mxu0 0
        %1064 = vmatpush.bf16.msra.mxu0 0
        %1065 = vmatpush.bf16.msra.mxu0 0
        %1066 = vmatpush.bf16.msra.mxu0 0
        %1067 = vmatpush.bf16.msra.mxu0 %v1058
        %1068 = vmatmul.bf16.gmra.mxu0 %v1054
        %v1069 = vpop.f32.mrf.mxu0
        %v1070 = vadd.f32 0.0, %v1069
        %v1071 = vpop.f32.mrf.mxu0
        %1072 = vdwg.mxu0
        %1073 = vrot.lane.b32.xlu0 %v881, 64
        %v1074 = vpop.permute.xlu0 %1073
        %v1076 = vsel %vm859, %v1048, 0
        %v1079 = vsel %vm1056, %v1074, 0
        %1081 = vmatpush.bf16.msra.mxu0 0
        %1082 = vmatpush.bf16.msra.mxu0 0
        %1083 = vmatpush.bf16.msra.mxu0 0
        %1084 = vmatpush.bf16.msra.mxu0 0
        %1085 = vmatpush.bf16.msra.mxu0 0
        %1086 = vmatpush.bf16.msra.mxu0 0
        %1087 = vmatpush.bf16.msra.mxu0 0
        %1088 = vmatpush.bf16.msra.mxu0 %v1079
        %1089 = vmatmul.bf16.gmra.mxu0 %v1076
        %v1090 = vpop.f32.mrf.mxu0
        %v1091 = vadd.f32 0.0, %v1090
        %v1092 = vpop.f32.mrf.mxu0
        %1093 = vdwg.mxu0
        %1094 = vrot.lane.b32.xlu0 %v905, 64
        %v1095 = vpop.permute.xlu0 %1094
        %v1097 = vsel %vm859, %v1049, 0
        %v1100 = vsel %vm1056, %v1095, 0
        %1102 = vmatpush.bf16.msra.mxu0 0
        %1103 = vmatpush.bf16.msra.mxu0 0
        %1104 = vmatpush.bf16.msra.mxu0 0
        %1105 = vmatpush.bf16.msra.mxu0 0
        %1106 = vmatpush.bf16.msra.mxu0 0
        %1107 = vmatpush.bf16.msra.mxu0 0
        %1108 = vmatpush.bf16.msra.mxu0 0
        %1109 = vmatpush.bf16.msra.mxu0 %v1100
        %1110 = vmatmul.bf16.gmra.mxu0 %v1097
        %v1111 = vpop.f32.mrf.mxu0
        %v1112 = vadd.f32 0.0, %v1111
        %v1113 = vpop.f32.mrf.mxu0
        %1114 = vdwg.mxu0
        %1115 = vrot.lane.b32.xlu0 %v929, 64
        %v1116 = vpop.permute.xlu0 %1115
        %v1118 = vsel %vm859, %v1050, 0
        %v1121 = vsel %vm1056, %v1116, 0
        %1123 = vmatpush.bf16.msra.mxu0 0
        %1124 = vmatpush.bf16.msra.mxu0 0
        %1125 = vmatpush.bf16.msra.mxu0 0
        %1126 = vmatpush.bf16.msra.mxu0 0
        %1127 = vmatpush.bf16.msra.mxu0 0
        %1128 = vmatpush.bf16.msra.mxu0 0
        %1129 = vmatpush.bf16.msra.mxu0 0
        %1130 = vmatpush.bf16.msra.mxu0 %v1121
        %1131 = vmatmul.bf16.gmra.mxu0 %v1118
        %v1132 = vpop.f32.mrf.mxu0
        %v1133 = vadd.f32 0.0, %v1132
        %v1134 = vpop.f32.mrf.mxu0
        %1135 = vdwg.mxu0
        %1137 = vrot.lane.b32.xlu0 %v1091, 8
        %v1138 = vpop.permute.xlu0 %1137
        %1141 = vrot.lane.b32.xlu0 %v1112, 16
        %v1142 = vpop.permute.xlu0 %1141
        %1145 = vrot.lane.b32.xlu0 %v1133, 24
        %v1146 = vpop.permute.xlu0 %1145
        %v1148 = vsel %vm859, %v1070, %v1138
        %vm1149 = vcmask 130048
        %v1150 = vsel %vm1149, %v1148, %v1142
        %vm1151 = vcmask 195584
        %v1152 = vsel %vm1151, %v1150, %v1146
        %v1153 = vpack.c.bf16 %v1152, %v1152
        %v1154 = vld [vmem:[%s722] sm:$0xf]
        %v1155 = vld [vmem:[%s722 + $0x4] sm:$0xf]
        %v1156 = vld [vmem:[%s722 + $0x8] sm:$0xf]
        %v1157 = vld [vmem:[%s722 + $0xc] sm:$0xf]
        %v1158 = vld [vmem:[%s725] sm:$0x1]
        %v1160 = vperm.slane %v1158, 0
        %v1166 = vunpack.c.l.b16 %v1154
        %v1167 = vunpack.c.l.b16 %v1155
        %v1168 = vunpack.c.l.b16 %v1156
        %v1169 = vunpack.c.l.b16 %v1157
        %v1170 = vpack.c.b16 %v1167, %v1166
        %v1171 = vpack.c.b16 %v1169, %v1168
        %v1175 = vsel %vm759, %v1153, 0
        %1177 = vmatpush.bf16.msra.mxu0 0
        %1178 = vmatpush.bf16.msra.mxu0 0
        %1179 = vmatpush.bf16.msra.mxu0 0
        %1180 = vmatpush.bf16.msra.mxu0 0
        %1181 = vmatpush.bf16.msra.mxu0 0
        %1182 = vmatpush.bf16.msra.mxu0 0
        %1183 = vmatpush.bf16.msra.mxu0 %v1171
        %1184 = vmatpush.bf16.msra.mxu0 %v1170
        %1185 = vmatmul.bf16.gmra.mxu0 %v1175
        %v1186 = vpop.f32.mrf.mxu0
        %v1187 = vadd.f32 %v1160, %v1186
        %v1188 = vpop.f32.mrf.mxu0
        %1189 = vdwg.mxu0
        %v1190 = vadd.f32 %v796, %v1187
        %v1191 = vld [vmem:[%s728] sm:$0x1]
        %v1192 = vld [vmem:[%s731] sm:$0x1]
        %v1193 = vsel %vm759, %v1190, 0.0
        %1194 = vadd.xlane.f32.xlu0 %v1193
        %v1195 = vpop.xlane.xlu0 %1194
        %v1196 = vmul.f32 %v1195, %v769
        %v1197 = vsub.f32 %v1190, %v1196
        %v1198 = vmul.f32 %v1197, %v1197
        %v1199 = vsel %vm759, %v1198, 0.0
        %1200 = vadd.xlane.f32.xlu0 %v1199
        %v1201 = vpop.xlane.xlu0 %1200
        %v1202 = vmul.f32 %v1201, %v769
        %v1203 = vadd.f32 %v1202, 1e-05
        %v1204 = vrsqrt.pop %v1203
        %v1205 = vmul.f32 %v1204, %v1203
        %v1206 = vmul.f32 %v1205, %v1204
        %v1207 = vmul.f32 0.5, %v1206
        %v1208 = vsub.f32 1.5, %v1207
        %v1209 = vmul.f32 %v1204, %v1208
        %vm1210 = vweird.f32 %v1203
        %vm1211 = vweird.f32 %v1204
        %vm1212 = vmor %vm1210, %vm1211
        %v1213 = vsel %vm1212, %v1204, %v1209
        %v1214 = vmul.f32 %v1197, %v1213
        %v1216 = vperm.slane %v1191, 0
        %v1218 = vmul.f32 %v1214, %v1216
        %v1220 = vperm.slane %v1192, 0
        %v1222 = vadd.f32 %v1218, %v1220
        %v1223 = vpack.c.bf16 %v1222, %v1222
        %v1224 = vld [vmem:[%s736] sm:$0xf]
        %v1225 = vld [vmem:[%s736 + $0x4] sm:$0xf]
        %v1226 = vld [vmem:[%s736 + $0x8] sm:$0xf]
        %v1227 = vld [vmem:[%s736 + $0xc] sm:$0xf]
        %v1228 = vld [vmem:[%s739] sm:$0x1]
        %v1230 = vperm.slane %v1228, 0
        %v1236 = vunpack.c.l.b16 %v1224
        %v1237 = vunpack.c.l.b16 %v1225
        %v1238 = vunpack.c.l.b16 %v1226
        %v1239 = vunpack.c.l.b16 %v1227
        %v1240 = vpack.c.b16 %v1237, %v1236
        %v1241 = vpack.c.b16 %v1239, %v1238
        %v1245 = vsel %vm759, %v1223, 0
        %1247 = vmatpush.bf16.msra.mxu0 0
        %1248 = vmatpush.bf16.msra.mxu0 0
        %1249 = vmatpush.bf16.msra.mxu0 0
        %1250 = vmatpush.bf16.msra.mxu0 0
        %1251 = vmatpush.bf16.msra.mxu0 0
        %1252 = vmatpush.bf16.msra.mxu0 0
        %1253 = vmatpush.bf16.msra.mxu0 %v1241
        %1254 = vmatpush.bf16.msra.mxu0 %v1240
        %1255 = vmatmul.bf16.gmra.mxu0 %v1245
        %v1256 = vpop.f32.mrf.mxu0
        %v1257 = vadd.f32 %v1230, %v1256
        %v1258 = vpop.f32.mrf.mxu0
        %1259 = vdwg.mxu0
        %v1260 = vmax.f32 %v1257, 0.0
        %v1261 = vpack.c.bf16 %v1260, %v1260
        %v1262 = vld [vmem:[%s744] sm:$0xf]
        %v1263 = vld [vmem:[%s744 + $0x4] sm:$0xf]
        %v1264 = vld [vmem:[%s744 + $0x8] sm:$0xf]
        %v1265 = vld [vmem:[%s744 + $0xc] sm:$0xf]
        %v1266 = vld [vmem:[%s744 + $0x10] sm:$0xf]
        %v1267 = vld [vmem:[%s744 + $0x14] sm:$0xf]
        %v1268 = vld [vmem:[%s744 + $0x18] sm:$0xf]
        %v1269 = vld [vmem:[%s744 + $0x1c] sm:$0xf]
        %v1270 = vld [vmem:[%s744 + $0x20] sm:$0xf]
        %v1271 = vld [vmem:[%s744 + $0x24] sm:$0xf]
        %v1272 = vld [vmem:[%s744 + $0x28] sm:$0xf]
        %v1273 = vld [vmem:[%s744 + $0x2c] sm:$0xf]
        %v1274 = vld [vmem:[%s744 + $0x30] sm:$0xf]
        %v1275 = vld [vmem:[%s744 + $0x34] sm:$0xf]
        %v1276 = vld [vmem:[%s744 + $0x38] sm:$0xf]
        %v1277 = vld [vmem:[%s744 + $0x3c] sm:$0xf]
        %v1278 = vld [vmem:[%s747] sm:$0x1]
        %v1280 = vperm.slane %v1278, 0
        %v1298 = vunpack.c.l.b16 %v1262
        %v1299 = vunpack.c.l.b16 %v1263
        %v1300 = vunpack.c.l.b16 %v1264
        %v1301 = vunpack.c.l.b16 %v1265
        %v1302 = vunpack.c.l.b16 %v1266
        %v1303 = vunpack.c.l.b16 %v1267
        %v1304 = vunpack.c.l.b16 %v1268
        %v1305 = vunpack.c.l.b16 %v1269
        %v1306 = vunpack.c.l.b16 %v1270
        %v1307 = vunpack.c.l.b16 %v1271
        %v1308 = vunpack.c.l.b16 %v1272
        %v1309 = vunpack.c.l.b16 %v1273
        %v1310 = vunpack.c.l.b16 %v1274
        %v1311 = vunpack.c.l.b16 %v1275
        %v1312 = vunpack.c.l.b16 %v1276
        %v1313 = vunpack.c.l.b16 %v1277
        %v1314 = vpack.c.b16 %v1299, %v1298
        %v1315 = vpack.c.b16 %v1301, %v1300
        %v1316 = vpack.c.b16 %v1303, %v1302
        %v1317 = vpack.c.b16 %v1305, %v1304
        %v1318 = vpack.c.b16 %v1307, %v1306
        %v1319 = vpack.c.b16 %v1309, %v1308
        %v1320 = vpack.c.b16 %v1311, %v1310
        %v1321 = vpack.c.b16 %v1313, %v1312
        %1330 = vmatpush.bf16.msra.mxu0 %v1321
        %1331 = vmatpush.bf16.msra.mxu0 %v1320
        %1332 = vmatpush.bf16.msra.mxu0 %v1319
        %1333 = vmatpush.bf16.msra.mxu0 %v1318
        %1334 = vmatpush.bf16.msra.mxu0 %v1317
        %1335 = vmatpush.bf16.msra.mxu0 %v1316
        %1336 = vmatpush.bf16.msra.mxu0 %v1315
        %1337 = vmatpush.bf16.msra.mxu0 %v1314
        %1338 = vmatmul.bf16.gmra.mxu0 %v1261
        %v1339 = vpop.f32.mrf.mxu0
        %v1340 = vadd.f32 %v1280, %v1339
        %v1341 = vpop.f32.mrf.mxu0
        %1342 = vdwg.mxu0
        %v1343 = vadd.f32 %v1222, %v1340
        %1344 = vst.msk [vmem:[#allocation2] sm:$0xff] %vm759, %v1343
        %p1345 = scmp.eq.s32.totalorder %s36, 1
        // Predicated region
        $region93: #{tpu_custom_call.1} parent=87 // pred_check
          %p1346 = pneg %p1345
        $region94: #{tpu_custom_call.1} parent=87 // pred_check_branch
          %1348 = sbr.rel (%p1346) target = $region96
        $region95: #{tpu_custom_call.1} parent=87 // pred_region
          %v1349 = vld [vmem:[%s13] sm:$0x1]
          %v1350 = vld [vmem:[%s14] sm:$0x1]
          %v1351 = vsel %vm759, %v1343, 0.0
          %1352 = vadd.xlane.f32.xlu0 %v1351
          %v1353 = vpop.xlane.xlu0 %1352
          %v1354 = vmul.f32 %v1353, %v769
          %v1355 = vsub.f32 %v1343, %v1354
          %v1356 = vmul.f32 %v1355, %v1355
          %v1357 = vsel %vm759, %v1356, 0.0
          %1358 = vadd.xlane.f32.xlu0 %v1357
          %v1359 = vpop.xlane.xlu0 %1358
          %v1360 = vmul.f32 %v1359, %v769
          %v1361 = vadd.f32 %v1360, 1e-05
          %v1362 = vrsqrt.pop %v1361
          %v1363 = vmul.f32 %v1362, %v1361
          %v1364 = vmul.f32 %v1363, %v1362
          %v1365 = vmul.f32 0.5, %v1364
          %v1366 = vsub.f32 1.5, %v1365
          %v1367 = vmul.f32 %v1362, %v1366
          %vm1368 = vweird.f32 %v1361
          %vm1369 = vweird.f32 %v1362
          %vm1370 = vmor %vm1368, %vm1369
          %v1371 = vsel %vm1370, %v1362, %v1367
          %v1372 = vmul.f32 %v1355, %v1371
          %v1374 = vperm.slane %v1349, 0
          %v1376 = vmul.f32 %v1372, %v1374
          %v1378 = vperm.slane %v1350, 0
          %v1380 = vadd.f32 %v1376, %v1378
          %v1381 = vpack.c.bf16 %v1380, %v1380
          %v1382 = vld [vmem:[%s15] sm:$0xf]
          %v1383 = vld [vmem:[%s15 + $0x4] sm:$0xf]
          %v1384 = vld [vmem:[%s15 + $0x8] sm:$0xf]
          %v1385 = vld [vmem:[%s15 + $0xc] sm:$0xf]
          %v1386 = vld [vmem:[%s16] sm:$0x1]
          %v1388 = vperm.slane %v1386, 0
          %v1394 = vunpack.c.l.b16 %v1382
          %v1395 = vunpack.c.l.b16 %v1383
          %v1396 = vunpack.c.l.b16 %v1384
          %v1397 = vunpack.c.l.b16 %v1385
          %v1398 = vpack.c.b16 %v1395, %v1394
          %v1399 = vpack.c.b16 %v1397, %v1396
          %v1403 = vsel %vm759, %v1381, 0
          %1405 = vmatpush.bf16.msra.mxu0 0
          %1406 = vmatpush.bf16.msra.mxu0 0
          %1407 = vmatpush.bf16.msra.mxu0 0
          %1408 = vmatpush.bf16.msra.mxu0 0
          %1409 = vmatpush.bf16.msra.mxu0 0
          %1410 = vmatpush.bf16.msra.mxu0 0
          %1411 = vmatpush.bf16.msra.mxu0 %v1399
          %1412 = vmatpush.bf16.msra.mxu0 %v1398
          %1413 = vmatmul.bf16.gmra.mxu0 %v1403
          %v1414 = vpop.f32.mrf.mxu0
          %v1415 = vadd.f32 %v1388, %v1414
          %v1416 = vpop.f32.mrf.mxu0
          %1417 = vdwg.mxu0
          %1418 = vst [vmem:[%s699] sm:$0xff] %v1415
        $region96: #{tpu_custom_call.1} parent=87 // pred_fallthru
          _
        %s1419 = sand.u32 %s473, 1
        %s1420 = scalar_lea.sflag [#allocation4], %s1419
        %s1421 = sand.u32 %s473, 1
        %s1422 = smul.addr %s1421, 8
        %s1423 = scalar_lea.vmem [#allocation3], %s1422
        // Predicated region
        $region97: #{tpu_custom_call.1} parent=87 // pred_check
          %p1424 = pneg %p483
        $region98: #{tpu_custom_call.1} parent=87 // pred_check_branch
          %1426 = sbr.rel (%p1424) target = $region100
        $region99: #{tpu_custom_call.1} parent=87 // pred_region
          %1428 = vsyncadd %s1420, 0
          %s1429 = smul.addr %s35, 8
          %s1430 = scalar_lea.hbm %s17, %s1429
          %s1432 = sshll.u32 %s1423, 4
          %s1433 = int_to_ptr.vmem [resolvable:$true] %s1432
          %s1434 = sshll.u32 %s1430, 4
          %s1435 = int_to_ptr.hbm [resolvable:$true] %s1434
          %1437 = dma.vmem_to_hbm [thread:$0]  %s1433, 128, %s1435, %s1420
        $region100: #{tpu_custom_call.1} parent=87 // pred_fallthru
          _
      $region88: #{tpu_custom_call.1} parent=5 // pred_fallthru
        _
      %p1438 = scmp.le.s32.totalorder 2, %s26
      // Predicated region
      $region101: #{tpu_custom_call.1} parent=5 // pred_check
        %p1439 = pneg %p1438
      $region102: #{tpu_custom_call.1} parent=5 // pred_check_branch
        %1441 = sbr.rel (%p1439) target = $region104
      $region103: #{tpu_custom_call.1} parent=5 // pred_region
        %s1442 = ssub.s32 %s26, 2
        // Predicated region
        $region105: #{tpu_custom_call.1} parent=103 // pred_check
          %p1443 = pneg %p489
        $region106: #{tpu_custom_call.1} parent=103 // pred_check_branch
          %1445 = sbr.rel (%p1443) target = $region108
        $region107: #{tpu_custom_call.1} parent=103 // pred_region
          %s1446 = sand.u32 %s474, 1
          %s1447 = scalar_lea.sflag [#allocation4], %s1446
          %s1448 = sand.u32 %s474, 1
          %s1449 = smul.addr %s1448, 8
          %s1450 = scalar_lea.vmem [#allocation3], %s1449
          %1452 = dma.done %s1447, 128
        $region108: #{tpu_custom_call.1} parent=103 // pred_fallthru
          _
      $region104: #{tpu_custom_call.1} parent=5 // pred_fallthru
        _
    $region6: #{tpu_custom_call.1} parent=1 // loop_footer
      %s30 = sadd.s32 1, %s26
    $region7: #{tpu_custom_call.1} parent=1 // loop_footer_branch
      %25 = sbr.rel target = $region3
    $region8: #{tpu_custom_call.1} parent=1 // loop_exit
      _
    %1453 = vsyncpa [#allocation4], 1
    %s1454 = scalar_lea.sflag [#allocation4], 1
    %1455 = vsyncpa %s1454, 1

</llo_original>
